<compile_context>
chip_gen: v7x
topology: tpu7x:2x2x1
jax: 0.10.0
libtpu: 0.0.40
codegen_flags: <defaults>
</compile_context>

<pallas_src>
import math
import functools

import jax
import jax.numpy as jnp
import numpy as np
from jax.experimental import pallas as pl
from jax.experimental.pallas import tpu as pltpu


def _mha_residual_kernel(x_ref, wqkv_ref, wo_ref, bqkv_ref, bo_ref, mask_ref,
                         o_ref, *, nhead):
    """One block of tb_n batch rows in the ORIGINAL (tb_n, J, V, D) layout:
    fused MHA + scaled residual, written back in the same layout."""
    tb_n, J, V, D = x_ref.shape
    B = tb_n * V                      # attention batch = flattened (n, v)
    HJ = nhead * J

    # ---- (tb_n, J, V, D) -> (B, J, D): per-v strided slices + major concat ----
    # (the (J,V) swap lives on the VMEM block; no wrapper HBM transpose)
    xt = jnp.concatenate(
        [x_ref[:, :, vi, :][:, None] for vi in range(V)], axis=1)   # (tb_n, V, J, D)
    x2d = xt.reshape(B * J, D)

    # ---- fused QKV projection (1/sqrt(head_dim) pre-folded into Q weights) ----
    qkv = jnp.dot(x2d, wqkv_ref[...], preferred_element_type=jnp.float32)
    qkv = (qkv + bqkv_ref[...]).reshape(B, J, 3 * D)
    q = qkv[:, :, 0:D]                                              # (B, J, D)
    k = qkv[:, :, D:2 * D]                                          # (B, J, D)
    v = qkv[:, :, 2 * D:3 * D]                                      # (B, J, D)

    # ---- all heads in TWO full-width matmuls via block-diagonal packing ----
    # mask[c, d] = 1 iff column d belongs to head (c // J); replicating K/V
    # nhead times along the key axis and masking makes a single K=D contraction
    # produce every head's (J, J) score block side by side along the lane axis.
    head_mask = mask_ref[...]                                       # (HJ, D)
    k_bd = jnp.concatenate([k] * nhead, axis=1) * head_mask         # (B, HJ, D)
    v_bd = jnp.concatenate([v] * nhead, axis=1) * head_mask         # (B, HJ, D)

    s = jnp.einsum('bqd,bcd->bqc', q, k_bd,
                   preferred_element_type=jnp.float32)              # (B, J, HJ)

    # per-head softmax over each J-wide segment of the lane axis (VPU/EUP only)
    p_parts = []
    for h in range(nhead):
        sh = s[:, :, h * J:(h + 1) * J]
        sh = sh - jnp.max(sh, axis=-1, keepdims=True)
        eh = jnp.exp(sh)
        inv = pl.reciprocal(jnp.sum(eh, axis=-1, keepdims=True), approx=True)
        p_parts.append(eh * inv)
    p = jnp.concatenate(p_parts, axis=-1)                           # (B, J, HJ)

    # P @ V_bd (K = nhead*J contraction) yields the per-head outputs already
    # concatenated along D -> single output-projection matmul afterwards.
    o = jnp.einsum('bqc,bcd->bqd', p, v_bd,
                   preferred_element_type=jnp.float32)              # (B, J, D)

    # ---- output projection + residual (0.2 residual scale folded into wo/bo) ----
    out = jnp.dot(o.reshape(B * J, D), wo_ref[...],
                  preferred_element_type=jnp.float32) + bo_ref[...]
    y = (x2d + out).reshape(tb_n, V, J, D)

    # ---- write back in the ORIGINAL (tb_n, J, V, D) layout ----
    for vi in range(V):
        o_ref[:, :, vi, :] = y[:, vi, :, :].astype(o_ref.dtype)


def _num_tensorcores():
    """Best-effort TensorCore count: grid splitting only pays on 2-TC chips
    (v4 / v5p / v7x); on single-TC v5e/v6e extra grid steps are pure overhead."""
    try:
        kind = jax.devices()[0].device_kind.lower()
    except Exception:
        return 1
    return 2 if any(tag in kind for tag in ("v7", "v4", "v5p")) else 1


def _pick_block_n(n, bytes_per_n, n_cores, vmem_budget_bytes=4 << 20):
    """Largest divisor of n giving at least `n_cores` grid steps (when n allows)
    and a bounded per-step VMEM working set."""
    max_n = max(1, vmem_budget_bytes // max(bytes_per_n, 1))
    best = 1
    for tb in range(1, n + 1):
        if n % tb or tb > max_n:
            continue
        if n // tb < min(n_cores, n):
            continue
        best = tb
    return best


def kernel_attention_transformer(src, params, nhead):
    """src: (N, J, V, D) float32 -> (N, J, V, D). Eval-mode forward."""
    N, J, V, D = src.shape
    assert D % nhead == 0
    head_dim = D // nhead
    HJ = nhead * J

    wq, wk, wv, wo, bq, bk, bv, bo = params

    # One-time weight prep (outside the kernel):
    #   * attention scale folded into the Q projection,
    #   * Q/K/V fused into a single (D, 3D) weight / (1, 3D) bias,
    #   * 0.2 residual scale folded into the output projection.
    scale = 1.0 / math.sqrt(head_dim)
    wqkv = jnp.concatenate([wq * scale, wk, wv], axis=1)   # (D, 3D)
    bqkv = jnp.concatenate([bq * scale, bk, bv], axis=1)   # (1, 3D)
    wo_s = wo * 0.2                                         # (D, D)
    bo_s = bo * 0.2                                         # (1, D)

    # Block-diagonal head mask (nhead*J, D): row c keeps only head (c // J).
    row_head = np.arange(HJ) // J
    col_head = np.arange(D) // head_dim
    head_mask = jnp.asarray(
        (row_head[:, None] == col_head[None, :]).astype(np.float32))

    # Rough per-n working set (double-buffered in/out blocks + intermediates).
    bytes_per_n = J * V * D * 4 * 16
    tb_n = _pick_block_n(N, bytes_per_n, _num_tensorcores())
    grid = (N // tb_n,)

    kern = functools.partial(_mha_residual_kernel, nhead=nhead)
    return pl.pallas_call(
        kern,
        out_shape=jax.ShapeDtypeStruct((N, J, V, D), src.dtype),
        grid_spec=pltpu.PrefetchScalarGridSpec(
            num_scalar_prefetch=0,
            grid=grid,
            in_specs=[
                pl.BlockSpec((tb_n, J, V, D), lambda i: (i, 0, 0, 0)),
                pl.BlockSpec((D, 3 * D), lambda i: (0, 0)),
                pl.BlockSpec((D, D), lambda i: (0, 0)),
                pl.BlockSpec((1, 3 * D), lambda i: (0, 0)),
                pl.BlockSpec((1, D), lambda i: (0, 0)),
                pl.BlockSpec((HJ, D), lambda i: (0, 0)),
            ],
            out_specs=pl.BlockSpec((tb_n, J, V, D), lambda i: (i, 0, 0, 0)),
        ),
        compiler_params=pltpu.CompilerParams(
            dimension_semantics=("parallel",)),
    )(src, wqkv, wo_s, bqkv, bo_s, head_mask)


def reference(src, params, nhead):
    """Pure-JAX reference of the same forward (silent correctness check)."""
    N, J, V, D = src.shape
    hd = D // nhead
    wq, wk, wv, wo, bq, bk, bv, bo = params
    x = jnp.transpose(src, (1, 0, 2, 3)).reshape(J, N * V, D)  # (J, B, D)
    q = x @ wq + bq
    k = x @ wk + bk
    v = x @ wv + bv

    def split(t):  # (J, B, D) -> (B, H, J, hd)
        return t.reshape(J, -1, nhead, hd).transpose(1, 2, 0, 3)

    qh, kh, vh = split(q), split(k), split(v)
    s = jnp.einsum('bhqd,bhkd->bhqk', qh, kh) / math.sqrt(hd)
    p = jax.nn.softmax(s, axis=-1)
    a = jnp.einsum('bhqk,bhkd->bhqd', p, vh)
    a = a.transpose(2, 0, 1, 3).reshape(J, -1, D)
    out = a @ wo + bo
    y = x + 0.2 * out
    return jnp.transpose(y.reshape(J, N, V, D), (1, 0, 2, 3))


if __name__ == "__main__":
    # Small shapes consistent with the module's forward.
    N, J, V, D = 2, 8, 4, 32
    nhead = 4

    key = jax.random.PRNGKey(0)
    ks = jax.random.split(key, 9)
    src = jax.random.normal(ks[0], (N, J, V, D), dtype=jnp.float32)

    # Deterministic synthetic MHA parameters (stored pre-transposed: y = x @ W + b).
    w_scale = 1.0 / math.sqrt(D)
    wq = jax.random.normal(ks[1], (D, D), dtype=jnp.float32) * w_scale
    wk = jax.random.normal(ks[2], (D, D), dtype=jnp.float32) * w_scale
    wv = jax.random.normal(ks[3], (D, D), dtype=jnp.float32) * w_scale
    wo = jax.random.normal(ks[4], (D, D), dtype=jnp.float32) * w_scale
    bq = jax.random.normal(ks[5], (1, D), dtype=jnp.float32) * 0.02
    bk = jax.random.normal(ks[6], (1, D), dtype=jnp.float32) * 0.02
    bv = jax.random.normal(ks[7], (1, D), dtype=jnp.float32) * 0.02
    bo = jax.random.normal(ks[8], (1, D), dtype=jnp.float32) * 0.02
    params = (wq, wk, wv, wo, bq, bk, bv, bo)

    out = kernel_attention_transformer(src, params, nhead)
    out = jax.block_until_ready(out)

    ref = jax.block_until_ready(reference(src, params, nhead))
    # Tolerance accounts for the approximate (EUP) reciprocal in the softmax.
    np.testing.assert_allclose(np.asarray(out), np.asarray(ref), rtol=2e-3, atol=2e-3)

    print("KERNEL_OK")
</pallas_src>

<mosaic_0001>
module attributes {stable_mosaic.version = 11 : i64} {
  func.func @_mha_residual_kernel(%arg0: i32, %arg1: memref<2x8x4x32xf32, #tpu.memory_space<vmem>>, %arg2: memref<32x96xf32, #tpu.memory_space<vmem>>, %arg3: memref<32x32xf32, #tpu.memory_space<vmem>>, %arg4: memref<1x96xf32, #tpu.memory_space<vmem>>, %arg5: memref<1x32xf32, #tpu.memory_space<vmem>>, %arg6: memref<32x32xf32, #tpu.memory_space<vmem>>, %arg7: memref<2x8x4x32xf32, #tpu.memory_space<vmem>>) attributes {dimension_semantics = [#tpu.dimension_semantics<parallel>], iteration_bounds = array<i64: 1>, scalar_prefetch = 0 : i64, scratch_operands = 0 : i64, tpu.core_type = #tpu.core_type<tc>, window_params = [{transform_indices = @transform_0, window_bounds = array<i64: 2, 8, 4, 32>}, {pipeline_mode = #tpu.pipeline_mode<synchronous>, transform_indices = @transform_1, window_bounds = array<i64: 32, 96>}, {pipeline_mode = #tpu.pipeline_mode<synchronous>, transform_indices = @transform_2, window_bounds = array<i64: 32, 32>}, {pipeline_mode = #tpu.pipeline_mode<synchronous>, transform_indices = @transform_3, window_bounds = array<i64: 1, 96>}, {pipeline_mode = #tpu.pipeline_mode<synchronous>, transform_indices = @transform_4, window_bounds = array<i64: 1, 32>}, {pipeline_mode = #tpu.pipeline_mode<synchronous>, transform_indices = @transform_5, window_bounds = array<i64: 32, 32>}, {transform_indices = @transform_6, window_bounds = array<i64: 2, 8, 4, 32>}]} {
    %c0 = arith.constant 0 : index
    %c0_0 = arith.constant 0 : index
    %c0_1 = arith.constant 0 : index
    %c0_2 = arith.constant 0 : index
    %0 = vector.load %arg1[%c0, %c0_0, %c0_1, %c0_2] : memref<2x8x4x32xf32, #tpu.memory_space<vmem>>, vector<2x8x1x32xf32>
    %1 = vector.shape_cast %0 : vector<2x8x1x32xf32> to vector<2x8x32xf32>
    %2 = vector.shape_cast %1 : vector<2x8x32xf32> to vector<2x1x8x32xf32>
    %c0_3 = arith.constant 0 : index
    %c0_4 = arith.constant 0 : index
    %c1 = arith.constant 1 : index
    %c0_5 = arith.constant 0 : index
    %3 = vector.load %arg1[%c0_3, %c0_4, %c1, %c0_5] : memref<2x8x4x32xf32, #tpu.memory_space<vmem>>, vector<2x8x1x32xf32>
    %4 = vector.shape_cast %3 : vector<2x8x1x32xf32> to vector<2x8x32xf32>
    %5 = vector.shape_cast %4 : vector<2x8x32xf32> to vector<2x1x8x32xf32>
    %c0_6 = arith.constant 0 : index
    %c0_7 = arith.constant 0 : index
    %c2 = arith.constant 2 : index
    %c0_8 = arith.constant 0 : index
    %6 = vector.load %arg1[%c0_6, %c0_7, %c2, %c0_8] : memref<2x8x4x32xf32, #tpu.memory_space<vmem>>, vector<2x8x1x32xf32>
    %7 = vector.shape_cast %6 : vector<2x8x1x32xf32> to vector<2x8x32xf32>
    %8 = vector.shape_cast %7 : vector<2x8x32xf32> to vector<2x1x8x32xf32>
    %c0_9 = arith.constant 0 : index
    %c0_10 = arith.constant 0 : index
    %c3 = arith.constant 3 : index
    %c0_11 = arith.constant 0 : index
    %9 = vector.load %arg1[%c0_9, %c0_10, %c3, %c0_11] : memref<2x8x4x32xf32, #tpu.memory_space<vmem>>, vector<2x8x1x32xf32>
    %10 = vector.shape_cast %9 : vector<2x8x1x32xf32> to vector<2x8x32xf32>
    %11 = vector.shape_cast %10 : vector<2x8x32xf32> to vector<2x1x8x32xf32>
    %12 = tpu.concatenate %2, %5, %8, %11 in 1 : vector<2x1x8x32xf32>, vector<2x1x8x32xf32>, vector<2x1x8x32xf32>, vector<2x1x8x32xf32> -> vector<2x4x8x32xf32>
    %13 = vector.shape_cast %12 : vector<2x4x8x32xf32> to vector<64x32xf32>
    %c0_12 = arith.constant 0 : index
    %c0_13 = arith.constant 0 : index
    %14 = vector.load %arg2[%c0_12, %c0_13] : memref<32x96xf32, #tpu.memory_space<vmem>>, vector<32x96xf32>
    %cst = arith.constant dense<0.000000e+00> : vector<64x96xf32>
    %15 = tpu.matmul %13, %14, %cst {dimension_numbers = #tpu.dot_dimension_numbers<[1], [0], [0], [1], [0, 0, 1, 1], [], []>} : vector<64x32xf32>, vector<32x96xf32>, vector<64x96xf32> -> vector<64x96xf32>
    %c0_14 = arith.constant 0 : index
    %c0_15 = arith.constant 0 : index
    %16 = vector.load %arg4[%c0_14, %c0_15] : memref<1x96xf32, #tpu.memory_space<vmem>>, vector<1x96xf32>
    %17 = vector.broadcast %16 : vector<1x96xf32> to vector<64x96xf32>
    %18 = arith.addf %15, %17 : vector<64x96xf32>
    %19 = vector.shape_cast %18 : vector<64x96xf32> to vector<8x8x96xf32>
    %20 = vector.extract_strided_slice %19 {offsets = [0, 0, 0], sizes = [8, 8, 32], strides = [1, 1, 1]} : vector<8x8x96xf32> to vector<8x8x32xf32>
    %21 = vector.extract_strided_slice %19 {offsets = [0, 0, 32], sizes = [8, 8, 32], strides = [1, 1, 1]} : vector<8x8x96xf32> to vector<8x8x32xf32>
    %22 = vector.extract_strided_slice %19 {offsets = [0, 0, 64], sizes = [8, 8, 32], strides = [1, 1, 1]} : vector<8x8x96xf32> to vector<8x8x32xf32>
    %c0_16 = arith.constant 0 : index
    %c0_17 = arith.constant 0 : index
    %23 = vector.load %arg6[%c0_16, %c0_17] : memref<32x32xf32, #tpu.memory_space<vmem>>, vector<32x32xf32>
    %24 = tpu.concatenate %21, %21, %21, %21 in 1 : vector<8x8x32xf32>, vector<8x8x32xf32>, vector<8x8x32xf32>, vector<8x8x32xf32> -> vector<8x32x32xf32>
    %25 = vector.shape_cast %23 : vector<32x32xf32> to vector<1x32x32xf32>
    %26 = vector.broadcast %25 : vector<1x32x32xf32> to vector<8x32x32xf32>
    %27 = arith.mulf %24, %26 : vector<8x32x32xf32>
    %28 = tpu.concatenate %22, %22, %22, %22 in 1 : vector<8x8x32xf32>, vector<8x8x32xf32>, vector<8x8x32xf32>, vector<8x8x32xf32> -> vector<8x32x32xf32>
    %29 = vector.shape_cast %23 : vector<32x32xf32> to vector<1x32x32xf32>
    %30 = vector.broadcast %29 : vector<1x32x32xf32> to vector<8x32x32xf32>
    %31 = arith.mulf %28, %30 : vector<8x32x32xf32>
    "tpu.trace_start"() <{level = 10 : i32, message = "bqd,bcd->bqc"}> : () -> ()
    %cst_18 = arith.constant dense<0.000000e+00> : vector<8x8x32xf32>
    %32 = tpu.matmul %20, %27, %cst_18 {dimension_numbers = #tpu.dot_dimension_numbers<[2], [2], [1], [1], [0, 0, 0, 1, 1, 1], [0], [0]>} : vector<8x8x32xf32>, vector<8x32x32xf32>, vector<8x8x32xf32> -> vector<8x8x32xf32>
    "tpu.trace_stop"() : () -> ()
    %33 = vector.extract_strided_slice %32 {offsets = [0, 0, 0], sizes = [8, 8, 8], strides = [1, 1, 1]} : vector<8x8x32xf32> to vector<8x8x8xf32>
    %cst_19 = arith.constant dense<0xFF800000> : vector<8x8xf32>
    %34 = vector.multi_reduction <maximumf>, %33, %cst_19 [2] : vector<8x8x8xf32> to vector<8x8xf32>
    %35 = vector.shape_cast %34 : vector<8x8xf32> to vector<8x8x1xf32>
    %36 = vector.broadcast %35 : vector<8x8x1xf32> to vector<8x8x8xf32>
    %37 = arith.subf %33, %36 : vector<8x8x8xf32>
    %38 = math.exp %37 : vector<8x8x8xf32>
    %cst_20 = arith.constant dense<0.000000e+00> : vector<8x8xf32>
    %39 = vector.multi_reduction <add>, %38, %cst_20 [2] : vector<8x8x8xf32> to vector<8x8xf32>
    %40 = vector.shape_cast %39 : vector<8x8xf32> to vector<8x8x1xf32>
    %41 = tpu.reciprocal %40 {approx = true} : vector<8x8x1xf32> -> vector<8x8x1xf32>
    %42 = vector.broadcast %41 : vector<8x8x1xf32> to vector<8x8x8xf32>
    %43 = arith.mulf %38, %42 : vector<8x8x8xf32>
    %44 = vector.extract_strided_slice %32 {offsets = [0, 0, 8], sizes = [8, 8, 8], strides = [1, 1, 1]} : vector<8x8x32xf32> to vector<8x8x8xf32>
    %cst_21 = arith.constant dense<0xFF800000> : vector<8x8xf32>
    %45 = vector.multi_reduction <maximumf>, %44, %cst_21 [2] : vector<8x8x8xf32> to vector<8x8xf32>
    %46 = vector.shape_cast %45 : vector<8x8xf32> to vector<8x8x1xf32>
    %47 = vector.broadcast %46 : vector<8x8x1xf32> to vector<8x8x8xf32>
    %48 = arith.subf %44, %47 : vector<8x8x8xf32>
    %49 = math.exp %48 : vector<8x8x8xf32>
    %cst_22 = arith.constant dense<0.000000e+00> : vector<8x8xf32>
    %50 = vector.multi_reduction <add>, %49, %cst_22 [2] : vector<8x8x8xf32> to vector<8x8xf32>
    %51 = vector.shape_cast %50 : vector<8x8xf32> to vector<8x8x1xf32>
    %52 = tpu.reciprocal %51 {approx = true} : vector<8x8x1xf32> -> vector<8x8x1xf32>
    %53 = vector.broadcast %52 : vector<8x8x1xf32> to vector<8x8x8xf32>
    %54 = arith.mulf %49, %53 : vector<8x8x8xf32>
    %55 = vector.extract_strided_slice %32 {offsets = [0, 0, 16], sizes = [8, 8, 8], strides = [1, 1, 1]} : vector<8x8x32xf32> to vector<8x8x8xf32>
    %cst_23 = arith.constant dense<0xFF800000> : vector<8x8xf32>
    %56 = vector.multi_reduction <maximumf>, %55, %cst_23 [2] : vector<8x8x8xf32> to vector<8x8xf32>
    %57 = vector.shape_cast %56 : vector<8x8xf32> to vector<8x8x1xf32>
    %58 = vector.broadcast %57 : vector<8x8x1xf32> to vector<8x8x8xf32>
    %59 = arith.subf %55, %58 : vector<8x8x8xf32>
    %60 = math.exp %59 : vector<8x8x8xf32>
    %cst_24 = arith.constant dense<0.000000e+00> : vector<8x8xf32>
    %61 = vector.multi_reduction <add>, %60, %cst_24 [2] : vector<8x8x8xf32> to vector<8x8xf32>
    %62 = vector.shape_cast %61 : vector<8x8xf32> to vector<8x8x1xf32>
    %63 = tpu.reciprocal %62 {approx = true} : vector<8x8x1xf32> -> vector<8x8x1xf32>
    %64 = vector.broadcast %63 : vector<8x8x1xf32> to vector<8x8x8xf32>
    %65 = arith.mulf %60, %64 : vector<8x8x8xf32>
    %66 = vector.extract_strided_slice %32 {offsets = [0, 0, 24], sizes = [8, 8, 8], strides = [1, 1, 1]} : vector<8x8x32xf32> to vector<8x8x8xf32>
    %cst_25 = arith.constant dense<0xFF800000> : vector<8x8xf32>
    %67 = vector.multi_reduction <maximumf>, %66, %cst_25 [2] : vector<8x8x8xf32> to vector<8x8xf32>
    %68 = vector.shape_cast %67 : vector<8x8xf32> to vector<8x8x1xf32>
    %69 = vector.broadcast %68 : vector<8x8x1xf32> to vector<8x8x8xf32>
    %70 = arith.subf %66, %69 : vector<8x8x8xf32>
    %71 = math.exp %70 : vector<8x8x8xf32>
    %cst_26 = arith.constant dense<0.000000e+00> : vector<8x8xf32>
    %72 = vector.multi_reduction <add>, %71, %cst_26 [2] : vector<8x8x8xf32> to vector<8x8xf32>
    %73 = vector.shape_cast %72 : vector<8x8xf32> to vector<8x8x1xf32>
    %74 = tpu.reciprocal %73 {approx = true} : vector<8x8x1xf32> -> vector<8x8x1xf32>
    %75 = vector.broadcast %74 : vector<8x8x1xf32> to vector<8x8x8xf32>
    %76 = arith.mulf %71, %75 : vector<8x8x8xf32>
    %77 = tpu.concatenate %43, %54, %65, %76 in 2 : vector<8x8x8xf32>, vector<8x8x8xf32>, vector<8x8x8xf32>, vector<8x8x8xf32> -> vector<8x8x32xf32>
    "tpu.trace_start"() <{level = 10 : i32, message = "bqc,bcd->bqd"}> : () -> ()
    %cst_27 = arith.constant dense<0.000000e+00> : vector<8x8x32xf32>
    %78 = tpu.matmul %77, %31, %cst_27 {dimension_numbers = #tpu.dot_dimension_numbers<[2], [1], [1], [2], [0, 0, 0, 1, 1, 2], [0], [0]>} : vector<8x8x32xf32>, vector<8x32x32xf32>, vector<8x8x32xf32> -> vector<8x8x32xf32>
    "tpu.trace_stop"() : () -> ()
    %79 = vector.shape_cast %78 : vector<8x8x32xf32> to vector<64x32xf32>
    %c0_28 = arith.constant 0 : index
    %c0_29 = arith.constant 0 : index
    %80 = vector.load %arg3[%c0_28, %c0_29] : memref<32x32xf32, #tpu.memory_space<vmem>>, vector<32x32xf32>
    %cst_30 = arith.constant dense<0.000000e+00> : vector<64x32xf32>
    %81 = tpu.matmul %79, %80, %cst_30 {dimension_numbers = #tpu.dot_dimension_numbers<[1], [0], [0], [1], [0, 0, 1, 1], [], []>} : vector<64x32xf32>, vector<32x32xf32>, vector<64x32xf32> -> vector<64x32xf32>
    %c0_31 = arith.constant 0 : index
    %c0_32 = arith.constant 0 : index
    %82 = vector.load %arg5[%c0_31, %c0_32] : memref<1x32xf32, #tpu.memory_space<vmem>>, vector<1x32xf32>
    %83 = vector.broadcast %82 : vector<1x32xf32> to vector<64x32xf32>
    %84 = arith.addf %81, %83 : vector<64x32xf32>
    %85 = arith.addf %13, %84 : vector<64x32xf32>
    %86 = vector.shape_cast %85 : vector<64x32xf32> to vector<2x4x8x32xf32>
    %87 = vector.extract_strided_slice %86 {offsets = [0, 0, 0, 0], sizes = [2, 1, 8, 32], strides = [1, 1, 1, 1]} : vector<2x4x8x32xf32> to vector<2x1x8x32xf32>
    %88 = vector.shape_cast %87 : vector<2x1x8x32xf32> to vector<2x8x32xf32>
    %c0_33 = arith.constant 0 : index
    %c0_34 = arith.constant 0 : index
    %c0_35 = arith.constant 0 : index
    %c0_36 = arith.constant 0 : index
    %89 = vector.load %arg7[%c0_33, %c0_34, %c0_35, %c0_36] : memref<2x8x4x32xf32, #tpu.memory_space<vmem>>, vector<2x8x1x32xf32>
    %90 = vector.shape_cast %89 : vector<2x8x1x32xf32> to vector<2x8x32xf32>
    %91 = vector.shape_cast %88 : vector<2x8x32xf32> to vector<2x8x1x32xf32>
    tpu.vector_store %arg7[%c0_33, %c0_34, %c0_35, %c0_36], %91 {strides = array<i32>} : memref<2x8x4x32xf32, #tpu.memory_space<vmem>>, vector<2x8x1x32xf32>,
    %92 = vector.extract_strided_slice %86 {offsets = [0, 1, 0, 0], sizes = [2, 1, 8, 32], strides = [1, 1, 1, 1]} : vector<2x4x8x32xf32> to vector<2x1x8x32xf32>
    %93 = vector.shape_cast %92 : vector<2x1x8x32xf32> to vector<2x8x32xf32>
    %c0_37 = arith.constant 0 : index
    %c0_38 = arith.constant 0 : index
    %c1_39 = arith.constant 1 : index
    %c0_40 = arith.constant 0 : index
    %94 = vector.load %arg7[%c0_37, %c0_38, %c1_39, %c0_40] : memref<2x8x4x32xf32, #tpu.memory_space<vmem>>, vector<2x8x1x32xf32>
    %95 = vector.shape_cast %94 : vector<2x8x1x32xf32> to vector<2x8x32xf32>
    %96 = vector.shape_cast %93 : vector<2x8x32xf32> to vector<2x8x1x32xf32>
    tpu.vector_store %arg7[%c0_37, %c0_38, %c1_39, %c0_40], %96 {strides = array<i32>} : memref<2x8x4x32xf32, #tpu.memory_space<vmem>>, vector<2x8x1x32xf32>,
    %97 = vector.extract_strided_slice %86 {offsets = [0, 2, 0, 0], sizes = [2, 1, 8, 32], strides = [1, 1, 1, 1]} : vector<2x4x8x32xf32> to vector<2x1x8x32xf32>
    %98 = vector.shape_cast %97 : vector<2x1x8x32xf32> to vector<2x8x32xf32>
    %c0_41 = arith.constant 0 : index
    %c0_42 = arith.constant 0 : index
    %c2_43 = arith.constant 2 : index
    %c0_44 = arith.constant 0 : index
    %99 = vector.load %arg7[%c0_41, %c0_42, %c2_43, %c0_44] : memref<2x8x4x32xf32, #tpu.memory_space<vmem>>, vector<2x8x1x32xf32>
    %100 = vector.shape_cast %99 : vector<2x8x1x32xf32> to vector<2x8x32xf32>
    %101 = vector.shape_cast %98 : vector<2x8x32xf32> to vector<2x8x1x32xf32>
    tpu.vector_store %arg7[%c0_41, %c0_42, %c2_43, %c0_44], %101 {strides = array<i32>} : memref<2x8x4x32xf32, #tpu.memory_space<vmem>>, vector<2x8x1x32xf32>,
    %102 = vector.extract_strided_slice %86 {offsets = [0, 3, 0, 0], sizes = [2, 1, 8, 32], strides = [1, 1, 1, 1]} : vector<2x4x8x32xf32> to vector<2x1x8x32xf32>
    %103 = vector.shape_cast %102 : vector<2x1x8x32xf32> to vector<2x8x32xf32>
    %c0_45 = arith.constant 0 : index
    %c0_46 = arith.constant 0 : index
    %c3_47 = arith.constant 3 : index
    %c0_48 = arith.constant 0 : index
    %104 = vector.load %arg7[%c0_45, %c0_46, %c3_47, %c0_48] : memref<2x8x4x32xf32, #tpu.memory_space<vmem>>, vector<2x8x1x32xf32>
    %105 = vector.shape_cast %104 : vector<2x8x1x32xf32> to vector<2x8x32xf32>
    %106 = vector.shape_cast %103 : vector<2x8x32xf32> to vector<2x8x1x32xf32>
    tpu.vector_store %arg7[%c0_45, %c0_46, %c3_47, %c0_48], %106 {strides = array<i32>} : memref<2x8x4x32xf32, #tpu.memory_space<vmem>>, vector<2x8x1x32xf32>,
    return
  }
  func.func @transform_0(%arg0: i32) -> (i32, i32, i32, i32) {
    %c0_i32 = arith.constant 0 : i32
    %c0_i32_0 = arith.constant 0 : i32
    %c0_i32_1 = arith.constant 0 : i32
    %c0_i32_2 = arith.constant 0 : i32
    return %arg0, %c0_i32, %c0_i32_0, %c0_i32_1 : i32, i32, i32, i32
  }
  func.func @transform_1(%arg0: i32) -> (i32, i32) {
    %c0_i32 = arith.constant 0 : i32
    %c0_i32_0 = arith.constant 0 : i32
    %c0_i32_1 = arith.constant 0 : i32
    return %c0_i32, %c0_i32_0 : i32, i32
  }
  func.func @transform_2(%arg0: i32) -> (i32, i32) {
    %c0_i32 = arith.constant 0 : i32
    %c0_i32_0 = arith.constant 0 : i32
    %c0_i32_1 = arith.constant 0 : i32
    return %c0_i32, %c0_i32_0 : i32, i32
  }
  func.func @transform_3(%arg0: i32) -> (i32, i32) {
    %c0_i32 = arith.constant 0 : i32
    %c0_i32_0 = arith.constant 0 : i32
    %c0_i32_1 = arith.constant 0 : i32
    return %c0_i32, %c0_i32_0 : i32, i32
  }
  func.func @transform_4(%arg0: i32) -> (i32, i32) {
    %c0_i32 = arith.constant 0 : i32
    %c0_i32_0 = arith.constant 0 : i32
    %c0_i32_1 = arith.constant 0 : i32
    return %c0_i32, %c0_i32_0 : i32, i32
  }
  func.func @transform_5(%arg0: i32) -> (i32, i32) {
    %c0_i32 = arith.constant 0 : i32
    %c0_i32_0 = arith.constant 0 : i32
    %c0_i32_1 = arith.constant 0 : i32
    return %c0_i32, %c0_i32_0 : i32, i32
  }
  func.func @transform_6(%arg0: i32) -> (i32, i32, i32, i32) {
    %c0_i32 = arith.constant 0 : i32
    %c0_i32_0 = arith.constant 0 : i32
    %c0_i32_1 = arith.constant 0 : i32
    %c0_i32_2 = arith.constant 0 : i32
    return %arg0, %c0_i32, %c0_i32_0, %c0_i32_1 : i32, i32, i32, i32
  }
}

</mosaic_0001>

<llo_original>
// kernel: tpu_custom_call.1
$region0: #{tpu_custom_call.1}
  #allocation0 [shape = 'u32[]', space=smem, size = 0x4, offset = 0x4, fixed_abs, tag = 'smem constant byte address 0x4 - core index']
  #allocation1 [shape = 'u32[144,128]{1,0:T(1,128)}', space=vmem, size = 0x12000, scoped, tag = 'internal scratch']
  %s0 = inlined_call_operand.hbm [shape: f32[2,8,4,32], index: 0, kind: input, shape index: {}]
  %s1 = inlined_call_operand.hbm [shape: f32[32,96], index: 1, kind: input, shape index: {}]
  %s2 = inlined_call_operand.hbm [shape: f32[32,32], index: 2, kind: input, shape index: {}]
  %s3 = inlined_call_operand.vmem [shape: f32[1,96], index: 3, kind: input, shape index: {}]
  %s4 = inlined_call_operand.vmem [shape: f32[1,32], index: 4, kind: input, shape index: {}]
  %s5 = inlined_call_operand.hbm [shape: f32[32,32], index: 5, kind: input, shape index: {}]
  %s6 = inlined_call_operand.hbm [shape: f32[2,8,4,32], index: 6, kind: output, shape index: {}]
  %s7 = sld [smem:[#allocation0]]
  $region50: #{tpu_custom_call.1} parent=0
    _
  %s9 = ssub.s32 1, %s7
  %s10 = scalar_select 0, %s9, %s7
  $region1: #{tpu_custom_call.1} parent=0
    #allocation2 [shape = 'u8[32768]{0}', space=vmem, size = 0x8000, scoped, tag = 'input window, operand 0, single buffered']
    #allocation3 [shape = 's32[1]{0}', space=sflag, size = 0x4, scoped, tag = 'scoped memory for tpu_custom_call.1']
    #allocation4 [shape = 's32[1]{0}', space=sflag, size = 0x4, scoped, tag = 'scoped memory for tpu_custom_call.1']
    #allocation5 [shape = 'u8[16384]{0}', space=vmem, size = 0x4000, scoped, tag = 'input window, operand 1, single buffered']
    #allocation6 [shape = 's32[1]{0}', space=sflag, size = 0x4, scoped, tag = 'scoped memory for tpu_custom_call.1']
    #allocation7 [shape = 'u8[16384]{0}', space=vmem, size = 0x4000, scoped, tag = 'input window, operand 2, single buffered']
    #allocation8 [shape = 'u8[16384]{0}', space=vmem, size = 0x4000, scoped, tag = 'input window, operand 5, single buffered']
    #allocation9 [shape = 's32[1]{0}', space=sflag, size = 0x4, scoped, tag = 'scoped memory for tpu_custom_call.1']
    #allocation10 [shape = 'u8[32768]{0}', space=vmem, size = 0x8000, scoped, tag = 'output window, operand 0, single buffered']
    %11 = vsyncpa [#allocation3], 0
    %12 = vsyncpa [#allocation6], 0
    %13 = vsyncpa [#allocation9], 0
    %14 = vsyncpa [#allocation4], 0
    // Predicated region
    $region2: #{tpu_custom_call.1} parent=1 // pred_check
      _
    $region3: #{tpu_custom_call.1} parent=1 // pred_check_branch
      %16 = sbr.rel (0) target = $region5
    $region4: #{tpu_custom_call.1} parent=1 // pred_region
      %s18 = ssub.s32 1024, 1024
      %19 = vsyncadd [#allocation3], %s18
      %s20 = sshll.u32 [#allocation2], 4
      %s21 = int_to_ptr.vmem [resolvable:$true] %s20
      %26 = dma.hbm_to_vmem [thread:$0]  %s0, 1024, %s21, [#allocation3], 64, 64, 4
    $region5: #{tpu_custom_call.1} parent=1 // pred_fallthru
      _
    // Predicated region
    $region6: #{tpu_custom_call.1} parent=1 // pred_check
      _
    $region7: #{tpu_custom_call.1} parent=1 // pred_check_branch
      %28 = sbr.rel (0) target = $region9
    $region8: #{tpu_custom_call.1} parent=1 // pred_region
      %s30 = ssub.s32 512, 512
      %31 = vsyncadd [#allocation6], %s30
      %s32 = sshll.u32 [#allocation5], 4
      %s33 = int_to_ptr.vmem [resolvable:$true] %s32
      %38 = dma.hbm_to_vmem [thread:$0]  %s1, 512, %s33, [#allocation6], 128, 128, 8
    $region9: #{tpu_custom_call.1} parent=1 // pred_fallthru
      _
    // Predicated region
    $region10: #{tpu_custom_call.1} parent=1 // pred_check
      _
    $region11: #{tpu_custom_call.1} parent=1 // pred_check_branch
      %40 = sbr.rel (0) target = $region13
    $region12: #{tpu_custom_call.1} parent=1 // pred_region
      %s42 = ssub.s32 512, 512
      %43 = vsyncadd [#allocation6], %s42
      %s44 = sshll.u32 [#allocation7], 4
      %s45 = int_to_ptr.vmem [resolvable:$true] %s44
      %50 = dma.hbm_to_vmem [thread:$0]  %s2, 512, %s45, [#allocation6], 128, 128, 8
    $region13: #{tpu_custom_call.1} parent=1 // pred_fallthru
      _
    // Predicated region
    $region14: #{tpu_custom_call.1} parent=1 // pred_check
      _
    $region15: #{tpu_custom_call.1} parent=1 // pred_check_branch
      %52 = sbr.rel (0) target = $region17
    $region16: #{tpu_custom_call.1} parent=1 // pred_region
      _
    $region17: #{tpu_custom_call.1} parent=1 // pred_fallthru
      _
    // Predicated region
    $region18: #{tpu_custom_call.1} parent=1 // pred_check
      _
    $region19: #{tpu_custom_call.1} parent=1 // pred_check_branch
      %54 = sbr.rel (0) target = $region21
    $region20: #{tpu_custom_call.1} parent=1 // pred_region
      _
    $region21: #{tpu_custom_call.1} parent=1 // pred_fallthru
      _
    // Predicated region
    $region22: #{tpu_custom_call.1} parent=1 // pred_check
      _
    $region23: #{tpu_custom_call.1} parent=1 // pred_check_branch
      %56 = sbr.rel (0) target = $region25
    $region24: #{tpu_custom_call.1} parent=1 // pred_region
      %s58 = ssub.s32 512, 512
      %59 = vsyncadd [#allocation9], %s58
      %s60 = sshll.u32 [#allocation8], 4
      %s61 = int_to_ptr.vmem [resolvable:$true] %s60
      %66 = dma.hbm_to_vmem [thread:$0]  %s5, 512, %s61, [#allocation9], 128, 128, 8
    $region25: #{tpu_custom_call.1} parent=1 // pred_fallthru
      _
    // Predicated region
    $region26: #{tpu_custom_call.1} parent=1 // pred_check
      _
    $region27: #{tpu_custom_call.1} parent=1 // pred_check_branch
      %68 = sbr.rel (0) target = $region29
    $region28: #{tpu_custom_call.1} parent=1 // pred_region
      %69 = dma.done [#allocation3], 1024
    $region29: #{tpu_custom_call.1} parent=1 // pred_fallthru
      _
    // Predicated region
    $region30: #{tpu_custom_call.1} parent=1 // pred_check
      _
    $region31: #{tpu_custom_call.1} parent=1 // pred_check_branch
      %71 = sbr.rel (0) target = $region33
    $region32: #{tpu_custom_call.1} parent=1 // pred_region
      %72 = dma.done [#allocation6], 512
    $region33: #{tpu_custom_call.1} parent=1 // pred_fallthru
      _
    // Predicated region
    $region34: #{tpu_custom_call.1} parent=1 // pred_check
      _
    $region35: #{tpu_custom_call.1} parent=1 // pred_check_branch
      %74 = sbr.rel (0) target = $region37
    $region36: #{tpu_custom_call.1} parent=1 // pred_region
      %75 = dma.done [#allocation6], 512
    $region37: #{tpu_custom_call.1} parent=1 // pred_fallthru
      _
    // Predicated region
    $region38: #{tpu_custom_call.1} parent=1 // pred_check
      _
    $region39: #{tpu_custom_call.1} parent=1 // pred_check_branch
      %77 = sbr.rel (0) target = $region41
    $region40: #{tpu_custom_call.1} parent=1 // pred_region
      %78 = dma.done [#allocation9], 512
    $region41: #{tpu_custom_call.1} parent=1 // pred_fallthru
      _
    %v79 = vld [vmem:[#allocation2] sm:$0x1]
    %v80 = vld [vmem:[#allocation2 + $0x4] sm:$0x1]
    %v81 = vld [vmem:[#allocation2 + $0x8] sm:$0x1]
    %v82 = vld [vmem:[#allocation2 + $0xc] sm:$0x1]
    %v83 = vld [vmem:[#allocation2 + $0x10] sm:$0x1]
    %v84 = vld [vmem:[#allocation2 + $0x14] sm:$0x1]
    %v85 = vld [vmem:[#allocation2 + $0x18] sm:$0x1]
    %v86 = vld [vmem:[#allocation2 + $0x1c] sm:$0x1]
    %v87 = vld [vmem:[#allocation2 + $0x20] sm:$0x1]
    %v88 = vld [vmem:[#allocation2 + $0x24] sm:$0x1]
    %v89 = vld [vmem:[#allocation2 + $0x28] sm:$0x1]
    %v90 = vld [vmem:[#allocation2 + $0x2c] sm:$0x1]
    %v91 = vld [vmem:[#allocation2 + $0x30] sm:$0x1]
    %v92 = vld [vmem:[#allocation2 + $0x34] sm:$0x1]
    %v93 = vld [vmem:[#allocation2 + $0x38] sm:$0x1]
    %v94 = vld [vmem:[#allocation2 + $0x3c] sm:$0x1]
    %v95 = vld [vmem:[#allocation2 + $0x1] sm:$0x1]
    %v96 = vld [vmem:[#allocation2 + $0x5] sm:$0x1]
    %v97 = vld [vmem:[#allocation2 + $0x9] sm:$0x1]
    %v98 = vld [vmem:[#allocation2 + $0xd] sm:$0x1]
    %v99 = vld [vmem:[#allocation2 + $0x11] sm:$0x1]
    %v100 = vld [vmem:[#allocation2 + $0x15] sm:$0x1]
    %v101 = vld [vmem:[#allocation2 + $0x19] sm:$0x1]
    %v102 = vld [vmem:[#allocation2 + $0x1d] sm:$0x1]
    %v103 = vld [vmem:[#allocation2 + $0x21] sm:$0x1]
    %v104 = vld [vmem:[#allocation2 + $0x25] sm:$0x1]
    %v105 = vld [vmem:[#allocation2 + $0x29] sm:$0x1]
    %v106 = vld [vmem:[#allocation2 + $0x2d] sm:$0x1]
    %v107 = vld [vmem:[#allocation2 + $0x31] sm:$0x1]
    %v108 = vld [vmem:[#allocation2 + $0x35] sm:$0x1]
    %v109 = vld [vmem:[#allocation2 + $0x39] sm:$0x1]
    %v110 = vld [vmem:[#allocation2 + $0x3d] sm:$0x1]
    %v111 = vld [vmem:[#allocation2 + $0x2] sm:$0x1]
    %v112 = vld [vmem:[#allocation2 + $0x6] sm:$0x1]
    %v113 = vld [vmem:[#allocation2 + $0xa] sm:$0x1]
    %v114 = vld [vmem:[#allocation2 + $0xe] sm:$0x1]
    %v115 = vld [vmem:[#allocation2 + $0x12] sm:$0x1]
    %v116 = vld [vmem:[#allocation2 + $0x16] sm:$0x1]
    %v117 = vld [vmem:[#allocation2 + $0x1a] sm:$0x1]
    %v118 = vld [vmem:[#allocation2 + $0x1e] sm:$0x1]
    %v119 = vld [vmem:[#allocation2 + $0x22] sm:$0x1]
    %v120 = vld [vmem:[#allocation2 + $0x26] sm:$0x1]
    %v121 = vld [vmem:[#allocation2 + $0x2a] sm:$0x1]
    %v122 = vld [vmem:[#allocation2 + $0x2e] sm:$0x1]
    %v123 = vld [vmem:[#allocation2 + $0x32] sm:$0x1]
    %v124 = vld [vmem:[#allocation2 + $0x36] sm:$0x1]
    %v125 = vld [vmem:[#allocation2 + $0x3a] sm:$0x1]
    %v126 = vld [vmem:[#allocation2 + $0x3e] sm:$0x1]
    %v127 = vld [vmem:[#allocation2 + $0x3] sm:$0x1]
    %v128 = vld [vmem:[#allocation2 + $0x7] sm:$0x1]
    %v129 = vld [vmem:[#allocation2 + $0xb] sm:$0x1]
    %v130 = vld [vmem:[#allocation2 + $0xf] sm:$0x1]
    %v131 = vld [vmem:[#allocation2 + $0x13] sm:$0x1]
    %v132 = vld [vmem:[#allocation2 + $0x17] sm:$0x1]
    %v133 = vld [vmem:[#allocation2 + $0x1b] sm:$0x1]
    %v134 = vld [vmem:[#allocation2 + $0x1f] sm:$0x1]
    %v135 = vld [vmem:[#allocation2 + $0x23] sm:$0x1]
    %v136 = vld [vmem:[#allocation2 + $0x27] sm:$0x1]
    %v137 = vld [vmem:[#allocation2 + $0x2b] sm:$0x1]
    %v138 = vld [vmem:[#allocation2 + $0x2f] sm:$0x1]
    %v139 = vld [vmem:[#allocation2 + $0x33] sm:$0x1]
    %v140 = vld [vmem:[#allocation2 + $0x37] sm:$0x1]
    %v141 = vld [vmem:[#allocation2 + $0x3b] sm:$0x1]
    %v142 = vld [vmem:[#allocation2 + $0x3f] sm:$0x1]
    %v143 = vld [vmem:[#allocation5] sm:$0xff]
    %v144 = vld [vmem:[#allocation5 + $0x8] sm:$0xff]
    %v145 = vld [vmem:[#allocation5 + $0x10] sm:$0xff]
    %v146 = vld [vmem:[#allocation5 + $0x18] sm:$0xff]
    %v147 = vld [vmem:[%s3] sm:$0x1]
    %v149 = vlaneseq
    %v150 = vshrl.u32 %v149, 7
    %v151 = vsub.s32 0, %v150
    %v152 = vrot.slane %v147, %v151
    %v218 = vrot.slane %v80, 7
    %vm219 = vcmask 1041409
    %v220 = vsel %vm219, %v218, %v79
    %v221 = vrot.slane %v81, 6
    %vm222 = vcmask 1042434
    %v223 = vsel %vm222, %v221, %v220
    %v224 = vrot.slane %v82, 5
    %vm225 = vcmask 1043459
    %v226 = vsel %vm225, %v224, %v223
    %v227 = vrot.slane %v83, 4
    %vm228 = vcmask 1044484
    %v229 = vsel %vm228, %v227, %v226
    %v230 = vrot.slane %v84, 3
    %vm231 = vcmask 1045509
    %v232 = vsel %vm231, %v230, %v229
    %v233 = vrot.slane %v85, 2
    %vm234 = vcmask 1046534
    %v235 = vsel %vm234, %v233, %v232
    %v236 = vrot.slane %v86, 1
    %vm237 = vcmask 1047559
    %v238 = vsel %vm237, %v236, %v235
    %v239 = vrot.slane %v96, 7
    %v240 = vsel %vm219, %v239, %v95
    %v241 = vrot.slane %v97, 6
    %v242 = vsel %vm222, %v241, %v240
    %v243 = vrot.slane %v98, 5
    %v244 = vsel %vm225, %v243, %v242
    %v245 = vrot.slane %v99, 4
    %v246 = vsel %vm228, %v245, %v244
    %v247 = vrot.slane %v100, 3
    %v248 = vsel %vm231, %v247, %v246
    %v249 = vrot.slane %v101, 2
    %v250 = vsel %vm234, %v249, %v248
    %v251 = vrot.slane %v102, 1
    %v252 = vsel %vm237, %v251, %v250
    %v253 = vrot.slane %v112, 7
    %v254 = vsel %vm219, %v253, %v111
    %v255 = vrot.slane %v113, 6
    %v256 = vsel %vm222, %v255, %v254
    %v257 = vrot.slane %v114, 5
    %v258 = vsel %vm225, %v257, %v256
    %v259 = vrot.slane %v115, 4
    %v260 = vsel %vm228, %v259, %v258
    %v261 = vrot.slane %v116, 3
    %v262 = vsel %vm231, %v261, %v260
    %v263 = vrot.slane %v117, 2
    %v264 = vsel %vm234, %v263, %v262
    %v265 = vrot.slane %v118, 1
    %v266 = vsel %vm237, %v265, %v264
    %v267 = vrot.slane %v128, 7
    %v268 = vsel %vm219, %v267, %v127
    %v269 = vrot.slane %v129, 6
    %v270 = vsel %vm222, %v269, %v268
    %v271 = vrot.slane %v130, 5
    %v272 = vsel %vm225, %v271, %v270
    %v273 = vrot.slane %v131, 4
    %v274 = vsel %vm228, %v273, %v272
    %v275 = vrot.slane %v132, 3
    %v276 = vsel %vm231, %v275, %v274
    %v277 = vrot.slane %v133, 2
    %v278 = vsel %vm234, %v277, %v276
    %v279 = vrot.slane %v134, 1
    %v280 = vsel %vm237, %v279, %v278
    %v281 = vrot.slane %v88, 7
    %v282 = vsel %vm219, %v281, %v87
    %v283 = vrot.slane %v89, 6
    %v284 = vsel %vm222, %v283, %v282
    %v285 = vrot.slane %v90, 5
    %v286 = vsel %vm225, %v285, %v284
    %v287 = vrot.slane %v91, 4
    %v288 = vsel %vm228, %v287, %v286
    %v289 = vrot.slane %v92, 3
    %v290 = vsel %vm231, %v289, %v288
    %v291 = vrot.slane %v93, 2
    %v292 = vsel %vm234, %v291, %v290
    %v293 = vrot.slane %v94, 1
    %v294 = vsel %vm237, %v293, %v292
    %v295 = vrot.slane %v104, 7
    %v296 = vsel %vm219, %v295, %v103
    %v297 = vrot.slane %v105, 6
    %v298 = vsel %vm222, %v297, %v296
    %v299 = vrot.slane %v106, 5
    %v300 = vsel %vm225, %v299, %v298
    %v301 = vrot.slane %v107, 4
    %v302 = vsel %vm228, %v301, %v300
    %v303 = vrot.slane %v108, 3
    %v304 = vsel %vm231, %v303, %v302
    %v305 = vrot.slane %v109, 2
    %v306 = vsel %vm234, %v305, %v304
    %v307 = vrot.slane %v110, 1
    %v308 = vsel %vm237, %v307, %v306
    %v309 = vrot.slane %v120, 7
    %v310 = vsel %vm219, %v309, %v119
    %v311 = vrot.slane %v121, 6
    %v312 = vsel %vm222, %v311, %v310
    %v313 = vrot.slane %v122, 5
    %v314 = vsel %vm225, %v313, %v312
    %v315 = vrot.slane %v123, 4
    %v316 = vsel %vm228, %v315, %v314
    %v317 = vrot.slane %v124, 3
    %v318 = vsel %vm231, %v317, %v316
    %v319 = vrot.slane %v125, 2
    %v320 = vsel %vm234, %v319, %v318
    %v321 = vrot.slane %v126, 1
    %v322 = vsel %vm237, %v321, %v320
    %v323 = vrot.slane %v136, 7
    %v324 = vsel %vm219, %v323, %v135
    %v325 = vrot.slane %v137, 6
    %v326 = vsel %vm222, %v325, %v324
    %v327 = vrot.slane %v138, 5
    %v328 = vsel %vm225, %v327, %v326
    %v329 = vrot.slane %v139, 4
    %v330 = vsel %vm228, %v329, %v328
    %v331 = vrot.slane %v140, 3
    %v332 = vsel %vm231, %v331, %v330
    %v333 = vrot.slane %v141, 2
    %v334 = vsel %vm234, %v333, %v332
    %v335 = vrot.slane %v142, 1
    %v336 = vsel %vm237, %v335, %v334
    %vm337 = vcmask 261120
    %v338 = vsel %vm337, %v238, 0
    %v340 = vsel %vm337, %v252, 0
    %v342 = vsel %vm337, %v266, 0
    %v344 = vsel %vm337, %v280, 0
    %v346 = vsel %vm337, %v294, 0
    %v348 = vsel %vm337, %v308, 0
    %v350 = vsel %vm337, %v322, 0
    %v352 = vsel %vm337, %v336, 0
    %354 = vmatprep.subr.mxu0 0.0
    %355 = vmatpush1.msra.mxu0 %v143
    %356 = vmatprep.subr.mxu0 0.0
    %357 = vmatpush1.msra.mxu0 %v144
    %358 = vmatprep.subr.mxu0 0.0
    %359 = vmatpush1.msra.mxu0 %v145
    %360 = vmatprep.subr.mxu0 0.0
    %361 = vmatpush1.msra.mxu0 %v146
    %362 = vmatprep.subr.mxu0 0.0
    %363 = vmatpush1.msra.mxu0 0.0
    %364 = vmatprep.subr.mxu0 0.0
    %365 = vmatpush1.msra.mxu0 0.0
    %366 = vmatprep.subr.mxu0 0.0
    %367 = vmatpush1.msra.mxu0 0.0
    %368 = vmatprep.subr.mxu0 0.0
    %369 = vmatpush1.msra.mxu0 0.0
    %370 = vmatprep.subr.mxu0 0.0
    %371 = vmatpush1.msra.mxu0 0.0
    %372 = vmatprep.subr.mxu0 0.0
    %373 = vmatpush1.msra.mxu0 0.0
    %374 = vmatprep.subr.mxu0 0.0
    %375 = vmatpush1.msra.mxu0 0.0
    %376 = vmatprep.subr.mxu0 0.0
    %377 = vmatpush1.msra.mxu0 0.0
    %378 = vmatprep.subr.mxu0 0.0
    %379 = vmatpush1.msra.mxu0 0.0
    %380 = vmatprep.subr.mxu0 0.0
    %381 = vmatpush1.msra.mxu0 0.0
    %382 = vmatprep.subr.mxu0 0.0
    %383 = vmatpush1.msra.mxu0 0.0
    %384 = vmatprep.subr.mxu0 0.0
    %385 = vmatpush1.msra.mxu0 0.0
    %386 = vmatprep.subr.mxu0 0.0
    %387 = vmatpush1.msra.mxu0 0.0
    %388 = vmatprep.subr.mxu0 0.0
    %389 = vmatpush1.msra.mxu0 0.0
    %390 = vmatprep.subr.mxu0 0.0
    %391 = vmatpush1.msra.mxu0 0.0
    %392 = vmatprep.subr.mxu0 0.0
    %393 = vmatpush1.msra.mxu0 0.0
    %394 = vmatprep.subr.mxu0 0.0
    %395 = vmatpush1.msra.mxu0 0.0
    %396 = vmatprep.subr.mxu0 0.0
    %397 = vmatpush1.msra.mxu0 0.0
    %398 = vmatprep.subr.mxu0 0.0
    %399 = vmatpush1.msra.mxu0 0.0
    %400 = vmatprep.subr.mxu0 0.0
    %401 = vmatpush1.msra.mxu0 0.0
    %402 = vmatprep.subr.mxu0 0.0
    %403 = vmatpush1.msra.mxu0 0.0
    %404 = vmatprep.subr.mxu0 0.0
    %405 = vmatpush1.msra.mxu0 0.0
    %406 = vmatprep.subr.mxu0 0.0
    %407 = vmatpush1.msra.mxu0 0.0
    %408 = vmatprep.subr.mxu0 0.0
    %409 = vmatpush1.msra.mxu0 0.0
    %410 = vmatprep.subr.mxu0 0.0
    %411 = vmatpush1.msra.mxu0 0.0
    %412 = vmatprep.subr.mxu0 0.0
    %413 = vmatpush1.msra.mxu0 0.0
    %414 = vmatprep.subr.mxu0 0.0
    %415 = vmatpush1.msra.mxu0 0.0
    %416 = vmatprep.subr.mxu0 0.0
    %417 = vmatpush1.msra.mxu0 0.0
    %418 = vmatprep.mubr.f32.mxu0 0.0
    %419 = vmatmul.mubr.f32.gmra.mrb[0].mxu0 %v338
    %v420 = vpop.f32.mrb[0].mxu0
    %v421 = vadd.f32 %v152, %v420
    %v422 = vpop.f32.mrb[0].mxu0
    %423 = vmatprep.mubr.f32.mxu0 0.0
    %424 = vmatmul.mubr.f32.gmra.mrb[0].mxu0 %v340
    %v425 = vpop.f32.mrb[0].mxu0
    %v426 = vadd.f32 %v152, %v425
    %v427 = vpop.f32.mrb[0].mxu0
    %428 = vmatprep.mubr.f32.mxu0 0.0
    %429 = vmatmul.mubr.f32.gmra.mrb[0].mxu0 %v342
    %v430 = vpop.f32.mrb[0].mxu0
    %v431 = vadd.f32 %v152, %v430
    %v432 = vpop.f32.mrb[0].mxu0
    %433 = vmatprep.mubr.f32.mxu0 0.0
    %434 = vmatmul.mubr.f32.gmra.mrb[0].mxu0 %v344
    %v435 = vpop.f32.mrb[0].mxu0
    %v436 = vadd.f32 %v152, %v435
    %v437 = vpop.f32.mrb[0].mxu0
    %438 = vmatprep.mubr.f32.mxu0 0.0
    %439 = vmatmul.mubr.f32.gmra.mrb[0].mxu0 %v346
    %v440 = vpop.f32.mrb[0].mxu0
    %v441 = vadd.f32 %v152, %v440
    %v442 = vpop.f32.mrb[0].mxu0
    %443 = vmatprep.mubr.f32.mxu0 0.0
    %444 = vmatmul.mubr.f32.gmra.mrb[0].mxu0 %v348
    %v445 = vpop.f32.mrb[0].mxu0
    %v446 = vadd.f32 %v152, %v445
    %v447 = vpop.f32.mrb[0].mxu0
    %448 = vmatprep.mubr.f32.mxu0 0.0
    %449 = vmatmul.mubr.f32.gmra.mrb[0].mxu0 %v350
    %v450 = vpop.f32.mrb[0].mxu0
    %v451 = vadd.f32 %v152, %v450
    %v452 = vpop.f32.mrb[0].mxu0
    %453 = vmatprep.mubr.f32.mxu0 0.0
    %454 = vmatmul.mubr.f32.gmra.mrb[0].mxu0 %v352
    %v455 = vpop.f32.mrb[0].mxu0
    %v456 = vadd.f32 %v152, %v455
    %v457 = vpop.f32.mrb[0].mxu0
    %458 = vdwg.mxu0
    %v459 = vld [vmem:[#allocation8] sm:$0xff]
    %v460 = vld [vmem:[#allocation8 + $0x8] sm:$0xff]
    %v461 = vld [vmem:[#allocation8 + $0x10] sm:$0xff]
    %v462 = vld [vmem:[#allocation8 + $0x18] sm:$0xff]
    %467 = vrot.lane.b32.xlu0 %v459, 32
    %v468 = vpop.permute.xlu0 %467
    %469 = vrot.lane.b32.xlu0 %v460, 32
    %v470 = vpop.permute.xlu0 %469
    %471 = vrot.lane.b32.xlu0 %v461, 32
    %v472 = vpop.permute.xlu0 %471
    %473 = vrot.lane.b32.xlu0 %v462, 32
    %v474 = vpop.permute.xlu0 %473
    %v479 = vmul.f32 %v421, %v468
    %v480 = vmul.f32 %v421, %v470
    %v481 = vmul.f32 %v421, %v472
    %v482 = vmul.f32 %v421, %v474
    %v483 = vmul.f32 %v426, %v468
    %v484 = vmul.f32 %v426, %v470
    %v485 = vmul.f32 %v426, %v472
    %v486 = vmul.f32 %v426, %v474
    %v487 = vmul.f32 %v431, %v468
    %v488 = vmul.f32 %v431, %v470
    %v489 = vmul.f32 %v431, %v472
    %v490 = vmul.f32 %v431, %v474
    %v491 = vmul.f32 %v436, %v468
    %v492 = vmul.f32 %v436, %v470
    %v493 = vmul.f32 %v436, %v472
    %v494 = vmul.f32 %v436, %v474
    %v495 = vmul.f32 %v441, %v468
    %v496 = vmul.f32 %v441, %v470
    %v497 = vmul.f32 %v441, %v472
    %v498 = vmul.f32 %v441, %v474
    %v499 = vmul.f32 %v446, %v468
    %v500 = vmul.f32 %v446, %v470
    %v501 = vmul.f32 %v446, %v472
    %v502 = vmul.f32 %v446, %v474
    %v503 = vmul.f32 %v451, %v468
    %v504 = vmul.f32 %v451, %v470
    %v505 = vmul.f32 %v451, %v472
    %v506 = vmul.f32 %v451, %v474
    %v507 = vmul.f32 %v456, %v468
    %v508 = vmul.f32 %v456, %v470
    %v509 = vmul.f32 %v456, %v472
    %v510 = vmul.f32 %v456, %v474
    %511 = vrot.lane.b32.xlu0 %v459, 64
    %v512 = vpop.permute.xlu0 %511
    %513 = vrot.lane.b32.xlu0 %v460, 64
    %v514 = vpop.permute.xlu0 %513
    %515 = vrot.lane.b32.xlu0 %v461, 64
    %v516 = vpop.permute.xlu0 %515
    %517 = vrot.lane.b32.xlu0 %v462, 64
    %v518 = vpop.permute.xlu0 %517
    %v523 = vmul.f32 %v421, %v512
    %v524 = vmul.f32 %v421, %v514
    %v525 = vmul.f32 %v421, %v516
    %v526 = vmul.f32 %v421, %v518
    %v527 = vmul.f32 %v426, %v512
    %v528 = vmul.f32 %v426, %v514
    %v529 = vmul.f32 %v426, %v516
    %v530 = vmul.f32 %v426, %v518
    %v531 = vmul.f32 %v431, %v512
    %v532 = vmul.f32 %v431, %v514
    %v533 = vmul.f32 %v431, %v516
    %v534 = vmul.f32 %v431, %v518
    %v535 = vmul.f32 %v436, %v512
    %v536 = vmul.f32 %v436, %v514
    %v537 = vmul.f32 %v436, %v516
    %v538 = vmul.f32 %v436, %v518
    %v539 = vmul.f32 %v441, %v512
    %v540 = vmul.f32 %v441, %v514
    %v541 = vmul.f32 %v441, %v516
    %v542 = vmul.f32 %v441, %v518
    %v543 = vmul.f32 %v446, %v512
    %v544 = vmul.f32 %v446, %v514
    %v545 = vmul.f32 %v446, %v516
    %v546 = vmul.f32 %v446, %v518
    %v547 = vmul.f32 %v451, %v512
    %v548 = vmul.f32 %v451, %v514
    %v549 = vmul.f32 %v451, %v516
    %v550 = vmul.f32 %v451, %v518
    %v551 = vmul.f32 %v456, %v512
    %v552 = vmul.f32 %v456, %v514
    %v553 = vmul.f32 %v456, %v516
    %v554 = vmul.f32 %v456, %v518
    %559 = vrot.lane.b32.xlu0 %v479, 96
    %v560 = vpop.permute.xlu0 %559
    %561 = vrot.lane.b32.xlu0 %v480, 96
    %v562 = vpop.permute.xlu0 %561
    %563 = vrot.lane.b32.xlu0 %v481, 96
    %v564 = vpop.permute.xlu0 %563
    %565 = vrot.lane.b32.xlu0 %v482, 96
    %v566 = vpop.permute.xlu0 %565
    %v568 = vsel %vm337, %v421, 0
    %v570 = vsel %vm337, %v560, 0
    %v572 = vsel %vm337, %v562, 0
    %v574 = vsel %vm337, %v564, 0
    %v576 = vsel %vm337, %v566, 0
    %578 = vmatprep.subr.mxu0 0.0
    %579 = vmatpush1.xpose.msra.mxu0 %v570
    %580 = vmatprep.subr.mxu0 0.0
    %581 = vmatpush1.xpose.msra.mxu0 %v572
    %582 = vmatprep.subr.mxu0 0.0
    %583 = vmatpush1.xpose.msra.mxu0 %v574
    %584 = vmatprep.subr.mxu0 0.0
    %585 = vmatpush1.xpose.msra.mxu0 %v576
    %586 = vmatprep.subr.mxu0 0.0
    %587 = vmatpush1.xpose.msra.mxu0 0.0
    %588 = vmatprep.subr.mxu0 0.0
    %589 = vmatpush1.xpose.msra.mxu0 0.0
    %590 = vmatprep.subr.mxu0 0.0
    %591 = vmatpush1.xpose.msra.mxu0 0.0
    %592 = vmatprep.subr.mxu0 0.0
    %593 = vmatpush1.xpose.msra.mxu0 0.0
    %594 = vmatprep.subr.mxu0 0.0
    %595 = vmatpush1.xpose.msra.mxu0 0.0
    %596 = vmatprep.subr.mxu0 0.0
    %597 = vmatpush1.xpose.msra.mxu0 0.0
    %598 = vmatprep.subr.mxu0 0.0
    %599 = vmatpush1.xpose.msra.mxu0 0.0
    %600 = vmatprep.subr.mxu0 0.0
    %601 = vmatpush1.xpose.msra.mxu0 0.0
    %602 = vmatprep.subr.mxu0 0.0
    %603 = vmatpush1.xpose.msra.mxu0 0.0
    %604 = vmatprep.subr.mxu0 0.0
    %605 = vmatpush1.xpose.msra.mxu0 0.0
    %606 = vmatprep.subr.mxu0 0.0
    %607 = vmatpush1.xpose.msra.mxu0 0.0
    %608 = vmatprep.subr.mxu0 0.0
    %609 = vmatpush1.xpose.msra.mxu0 0.0
    %610 = vmatprep.subr.mxu0 0.0
    %611 = vmatpush1.xpose.msra.mxu0 0.0
    %612 = vmatprep.subr.mxu0 0.0
    %613 = vmatpush1.xpose.msra.mxu0 0.0
    %614 = vmatprep.subr.mxu0 0.0
    %615 = vmatpush1.xpose.msra.mxu0 0.0
    %616 = vmatprep.subr.mxu0 0.0
    %617 = vmatpush1.xpose.msra.mxu0 0.0
    %618 = vmatprep.subr.mxu0 0.0
    %619 = vmatpush1.xpose.msra.mxu0 0.0
    %620 = vmatprep.subr.mxu0 0.0
    %621 = vmatpush1.xpose.msra.mxu0 0.0
    %622 = vmatprep.subr.mxu0 0.0
    %623 = vmatpush1.xpose.msra.mxu0 0.0
    %624 = vmatprep.subr.mxu0 0.0
    %625 = vmatpush1.xpose.msra.mxu0 0.0
    %626 = vmatprep.subr.mxu0 0.0
    %627 = vmatpush1.xpose.msra.mxu0 0.0
    %628 = vmatprep.subr.mxu0 0.0
    %629 = vmatpush1.xpose.msra.mxu0 0.0
    %630 = vmatprep.subr.mxu0 0.0
    %631 = vmatpush1.xpose.msra.mxu0 0.0
    %632 = vmatprep.subr.mxu0 0.0
    %633 = vmatpush1.xpose.msra.mxu0 0.0
    %634 = vmatprep.subr.mxu0 0.0
    %635 = vmatpush1.xpose.msra.mxu0 0.0
    %636 = vmatprep.subr.mxu0 0.0
    %637 = vmatpush1.xpose.msra.mxu0 0.0
    %638 = vmatprep.subr.mxu0 0.0
    %639 = vmatpush1.xpose.msra.mxu0 0.0
    %640 = vmatprep.subr.mxu0 0.0
    %641 = vmatpush1.xpose.msra.mxu0 0.0
    %642 = vmatprep.mubr.f32.mxu0 0.0
    %643 = vmatmul.mubr.f32.gmra.mrb[0].mxu0 %v568
    %v644 = vpop.f32.mrb[0].mxu0
    %v645 = vadd.f32 0.0, %v644
    %v646 = vpop.f32.mrb[0].mxu0
    %647 = vdwg.mxu0
    %652 = vrot.lane.b32.xlu0 %v483, 96
    %v653 = vpop.permute.xlu0 %652
    %654 = vrot.lane.b32.xlu0 %v484, 96
    %v655 = vpop.permute.xlu0 %654
    %656 = vrot.lane.b32.xlu0 %v485, 96
    %v657 = vpop.permute.xlu0 %656
    %658 = vrot.lane.b32.xlu0 %v486, 96
    %v659 = vpop.permute.xlu0 %658
    %v661 = vsel %vm337, %v426, 0
    %v663 = vsel %vm337, %v653, 0
    %v665 = vsel %vm337, %v655, 0
    %v667 = vsel %vm337, %v657, 0
    %v669 = vsel %vm337, %v659, 0
    %671 = vmatprep.subr.mxu0 0.0
    %672 = vmatpush1.xpose.msra.mxu0 %v663
    %673 = vmatprep.subr.mxu0 0.0
    %674 = vmatpush1.xpose.msra.mxu0 %v665
    %675 = vmatprep.subr.mxu0 0.0
    %676 = vmatpush1.xpose.msra.mxu0 %v667
    %677 = vmatprep.subr.mxu0 0.0
    %678 = vmatpush1.xpose.msra.mxu0 %v669
    %679 = vmatprep.subr.mxu0 0.0
    %680 = vmatpush1.xpose.msra.mxu0 0.0
    %681 = vmatprep.subr.mxu0 0.0
    %682 = vmatpush1.xpose.msra.mxu0 0.0
    %683 = vmatprep.subr.mxu0 0.0
    %684 = vmatpush1.xpose.msra.mxu0 0.0
    %685 = vmatprep.subr.mxu0 0.0
    %686 = vmatpush1.xpose.msra.mxu0 0.0
    %687 = vmatprep.subr.mxu0 0.0
    %688 = vmatpush1.xpose.msra.mxu0 0.0
    %689 = vmatprep.subr.mxu0 0.0
    %690 = vmatpush1.xpose.msra.mxu0 0.0
    %691 = vmatprep.subr.mxu0 0.0
    %692 = vmatpush1.xpose.msra.mxu0 0.0
    %693 = vmatprep.subr.mxu0 0.0
    %694 = vmatpush1.xpose.msra.mxu0 0.0
    %695 = vmatprep.subr.mxu0 0.0
    %696 = vmatpush1.xpose.msra.mxu0 0.0
    %697 = vmatprep.subr.mxu0 0.0
    %698 = vmatpush1.xpose.msra.mxu0 0.0
    %699 = vmatprep.subr.mxu0 0.0
    %700 = vmatpush1.xpose.msra.mxu0 0.0
    %701 = vmatprep.subr.mxu0 0.0
    %702 = vmatpush1.xpose.msra.mxu0 0.0
    %703 = vmatprep.subr.mxu0 0.0
    %704 = vmatpush1.xpose.msra.mxu0 0.0
    %705 = vmatprep.subr.mxu0 0.0
    %706 = vmatpush1.xpose.msra.mxu0 0.0
    %707 = vmatprep.subr.mxu0 0.0
    %708 = vmatpush1.xpose.msra.mxu0 0.0
    %709 = vmatprep.subr.mxu0 0.0
    %710 = vmatpush1.xpose.msra.mxu0 0.0
    %711 = vmatprep.subr.mxu0 0.0
    %712 = vmatpush1.xpose.msra.mxu0 0.0
    %713 = vmatprep.subr.mxu0 0.0
    %714 = vmatpush1.xpose.msra.mxu0 0.0
    %715 = vmatprep.subr.mxu0 0.0
    %716 = vmatpush1.xpose.msra.mxu0 0.0
    %717 = vmatprep.subr.mxu0 0.0
    %718 = vmatpush1.xpose.msra.mxu0 0.0
    %719 = vmatprep.subr.mxu0 0.0
    %720 = vmatpush1.xpose.msra.mxu0 0.0
    %721 = vmatprep.subr.mxu0 0.0
    %722 = vmatpush1.xpose.msra.mxu0 0.0
    %723 = vmatprep.subr.mxu0 0.0
    %724 = vmatpush1.xpose.msra.mxu0 0.0
    %725 = vmatprep.subr.mxu0 0.0
    %726 = vmatpush1.xpose.msra.mxu0 0.0
    %727 = vmatprep.subr.mxu0 0.0
    %728 = vmatpush1.xpose.msra.mxu0 0.0
    %729 = vmatprep.subr.mxu0 0.0
    %730 = vmatpush1.xpose.msra.mxu0 0.0
    %731 = vmatprep.subr.mxu0 0.0
    %732 = vmatpush1.xpose.msra.mxu0 0.0
    %733 = vmatprep.subr.mxu0 0.0
    %734 = vmatpush1.xpose.msra.mxu0 0.0
    %735 = vmatprep.mubr.f32.mxu0 0.0
    %736 = vmatmul.mubr.f32.gmra.mrb[0].mxu0 %v661
    %v737 = vpop.f32.mrb[0].mxu0
    %v738 = vadd.f32 0.0, %v737
    %v739 = vpop.f32.mrb[0].mxu0
    %740 = vdwg.mxu0
    %745 = vrot.lane.b32.xlu0 %v487, 96
    %v746 = vpop.permute.xlu0 %745
    %747 = vrot.lane.b32.xlu0 %v488, 96
    %v748 = vpop.permute.xlu0 %747
    %749 = vrot.lane.b32.xlu0 %v489, 96
    %v750 = vpop.permute.xlu0 %749
    %751 = vrot.lane.b32.xlu0 %v490, 96
    %v752 = vpop.permute.xlu0 %751
    %v754 = vsel %vm337, %v431, 0
    %v756 = vsel %vm337, %v746, 0
    %v758 = vsel %vm337, %v748, 0
    %v760 = vsel %vm337, %v750, 0
    %v762 = vsel %vm337, %v752, 0
    %764 = vmatprep.subr.mxu0 0.0
    %765 = vmatpush1.xpose.msra.mxu0 %v756
    %766 = vmatprep.subr.mxu0 0.0
    %767 = vmatpush1.xpose.msra.mxu0 %v758
    %768 = vmatprep.subr.mxu0 0.0
    %769 = vmatpush1.xpose.msra.mxu0 %v760
    %770 = vmatprep.subr.mxu0 0.0
    %771 = vmatpush1.xpose.msra.mxu0 %v762
    %772 = vmatprep.subr.mxu0 0.0
    %773 = vmatpush1.xpose.msra.mxu0 0.0
    %774 = vmatprep.subr.mxu0 0.0
    %775 = vmatpush1.xpose.msra.mxu0 0.0
    %776 = vmatprep.subr.mxu0 0.0
    %777 = vmatpush1.xpose.msra.mxu0 0.0
    %778 = vmatprep.subr.mxu0 0.0
    %779 = vmatpush1.xpose.msra.mxu0 0.0
    %780 = vmatprep.subr.mxu0 0.0
    %781 = vmatpush1.xpose.msra.mxu0 0.0
    %782 = vmatprep.subr.mxu0 0.0
    %783 = vmatpush1.xpose.msra.mxu0 0.0
    %784 = vmatprep.subr.mxu0 0.0
    %785 = vmatpush1.xpose.msra.mxu0 0.0
    %786 = vmatprep.subr.mxu0 0.0
    %787 = vmatpush1.xpose.msra.mxu0 0.0
    %788 = vmatprep.subr.mxu0 0.0
    %789 = vmatpush1.xpose.msra.mxu0 0.0
    %790 = vmatprep.subr.mxu0 0.0
    %791 = vmatpush1.xpose.msra.mxu0 0.0
    %792 = vmatprep.subr.mxu0 0.0
    %793 = vmatpush1.xpose.msra.mxu0 0.0
    %794 = vmatprep.subr.mxu0 0.0
    %795 = vmatpush1.xpose.msra.mxu0 0.0
    %796 = vmatprep.subr.mxu0 0.0
    %797 = vmatpush1.xpose.msra.mxu0 0.0
    %798 = vmatprep.subr.mxu0 0.0
    %799 = vmatpush1.xpose.msra.mxu0 0.0
    %800 = vmatprep.subr.mxu0 0.0
    %801 = vmatpush1.xpose.msra.mxu0 0.0
    %802 = vmatprep.subr.mxu0 0.0
    %803 = vmatpush1.xpose.msra.mxu0 0.0
    %804 = vmatprep.subr.mxu0 0.0
    %805 = vmatpush1.xpose.msra.mxu0 0.0
    %806 = vmatprep.subr.mxu0 0.0
    %807 = vmatpush1.xpose.msra.mxu0 0.0
    %808 = vmatprep.subr.mxu0 0.0
    %809 = vmatpush1.xpose.msra.mxu0 0.0
    %810 = vmatprep.subr.mxu0 0.0
    %811 = vmatpush1.xpose.msra.mxu0 0.0
    %812 = vmatprep.subr.mxu0 0.0
    %813 = vmatpush1.xpose.msra.mxu0 0.0
    %814 = vmatprep.subr.mxu0 0.0
    %815 = vmatpush1.xpose.msra.mxu0 0.0
    %816 = vmatprep.subr.mxu0 0.0
    %817 = vmatpush1.xpose.msra.mxu0 0.0
    %818 = vmatprep.subr.mxu0 0.0
    %819 = vmatpush1.xpose.msra.mxu0 0.0
    %820 = vmatprep.subr.mxu0 0.0
    %821 = vmatpush1.xpose.msra.mxu0 0.0
    %822 = vmatprep.subr.mxu0 0.0
    %823 = vmatpush1.xpose.msra.mxu0 0.0
    %824 = vmatprep.subr.mxu0 0.0
    %825 = vmatpush1.xpose.msra.mxu0 0.0
    %826 = vmatprep.subr.mxu0 0.0
    %827 = vmatpush1.xpose.msra.mxu0 0.0
    %828 = vmatprep.mubr.f32.mxu0 0.0
    %829 = vmatmul.mubr.f32.gmra.mrb[0].mxu0 %v754
    %v830 = vpop.f32.mrb[0].mxu0
    %v831 = vadd.f32 0.0, %v830
    %v832 = vpop.f32.mrb[0].mxu0
    %833 = vdwg.mxu0
    %838 = vrot.lane.b32.xlu0 %v491, 96
    %v839 = vpop.permute.xlu0 %838
    %840 = vrot.lane.b32.xlu0 %v492, 96
    %v841 = vpop.permute.xlu0 %840
    %842 = vrot.lane.b32.xlu0 %v493, 96
    %v843 = vpop.permute.xlu0 %842
    %844 = vrot.lane.b32.xlu0 %v494, 96
    %v845 = vpop.permute.xlu0 %844
    %v847 = vsel %vm337, %v436, 0
    %v849 = vsel %vm337, %v839, 0
    %v851 = vsel %vm337, %v841, 0
    %v853 = vsel %vm337, %v843, 0
    %v855 = vsel %vm337, %v845, 0
    %857 = vmatprep.subr.mxu0 0.0
    %858 = vmatpush1.xpose.msra.mxu0 %v849
    %859 = vmatprep.subr.mxu0 0.0
    %860 = vmatpush1.xpose.msra.mxu0 %v851
    %861 = vmatprep.subr.mxu0 0.0
    %862 = vmatpush1.xpose.msra.mxu0 %v853
    %863 = vmatprep.subr.mxu0 0.0
    %864 = vmatpush1.xpose.msra.mxu0 %v855
    %865 = vmatprep.subr.mxu0 0.0
    %866 = vmatpush1.xpose.msra.mxu0 0.0
    %867 = vmatprep.subr.mxu0 0.0
    %868 = vmatpush1.xpose.msra.mxu0 0.0
    %869 = vmatprep.subr.mxu0 0.0
    %870 = vmatpush1.xpose.msra.mxu0 0.0
    %871 = vmatprep.subr.mxu0 0.0
    %872 = vmatpush1.xpose.msra.mxu0 0.0
    %873 = vmatprep.subr.mxu0 0.0
    %874 = vmatpush1.xpose.msra.mxu0 0.0
    %875 = vmatprep.subr.mxu0 0.0
    %876 = vmatpush1.xpose.msra.mxu0 0.0
    %877 = vmatprep.subr.mxu0 0.0
    %878 = vmatpush1.xpose.msra.mxu0 0.0
    %879 = vmatprep.subr.mxu0 0.0
    %880 = vmatpush1.xpose.msra.mxu0 0.0
    %881 = vmatprep.subr.mxu0 0.0
    %882 = vmatpush1.xpose.msra.mxu0 0.0
    %883 = vmatprep.subr.mxu0 0.0
    %884 = vmatpush1.xpose.msra.mxu0 0.0
    %885 = vmatprep.subr.mxu0 0.0
    %886 = vmatpush1.xpose.msra.mxu0 0.0
    %887 = vmatprep.subr.mxu0 0.0
    %888 = vmatpush1.xpose.msra.mxu0 0.0
    %889 = vmatprep.subr.mxu0 0.0
    %890 = vmatpush1.xpose.msra.mxu0 0.0
    %891 = vmatprep.subr.mxu0 0.0
    %892 = vmatpush1.xpose.msra.mxu0 0.0
    %893 = vmatprep.subr.mxu0 0.0
    %894 = vmatpush1.xpose.msra.mxu0 0.0
    %895 = vmatprep.subr.mxu0 0.0
    %896 = vmatpush1.xpose.msra.mxu0 0.0
    %897 = vmatprep.subr.mxu0 0.0
    %898 = vmatpush1.xpose.msra.mxu0 0.0
    %899 = vmatprep.subr.mxu0 0.0
    %900 = vmatpush1.xpose.msra.mxu0 0.0
    %901 = vmatprep.subr.mxu0 0.0
    %902 = vmatpush1.xpose.msra.mxu0 0.0
    %903 = vmatprep.subr.mxu0 0.0
    %904 = vmatpush1.xpose.msra.mxu0 0.0
    %905 = vmatprep.subr.mxu0 0.0
    %906 = vmatpush1.xpose.msra.mxu0 0.0
    %907 = vmatprep.subr.mxu0 0.0
    %908 = vmatpush1.xpose.msra.mxu0 0.0
    %909 = vmatprep.subr.mxu0 0.0
    %910 = vmatpush1.xpose.msra.mxu0 0.0
    %911 = vmatprep.subr.mxu0 0.0
    %912 = vmatpush1.xpose.msra.mxu0 0.0
    %913 = vmatprep.subr.mxu0 0.0
    %914 = vmatpush1.xpose.msra.mxu0 0.0
    %915 = vmatprep.subr.mxu0 0.0
    %916 = vmatpush1.xpose.msra.mxu0 0.0
    %917 = vmatprep.subr.mxu0 0.0
    %918 = vmatpush1.xpose.msra.mxu0 0.0
    %919 = vmatprep.subr.mxu0 0.0
    %920 = vmatpush1.xpose.msra.mxu0 0.0
    %921 = vmatprep.mubr.f32.mxu0 0.0
    %922 = vmatmul.mubr.f32.gmra.mrb[0].mxu0 %v847
    %v923 = vpop.f32.mrb[0].mxu0
    %v924 = vadd.f32 0.0, %v923
    %v925 = vpop.f32.mrb[0].mxu0
    %926 = vdwg.mxu0
    %931 = vrot.lane.b32.xlu0 %v495, 96
    %v932 = vpop.permute.xlu0 %931
    %933 = vrot.lane.b32.xlu0 %v496, 96
    %v934 = vpop.permute.xlu0 %933
    %935 = vrot.lane.b32.xlu0 %v497, 96
    %v936 = vpop.permute.xlu0 %935
    %937 = vrot.lane.b32.xlu0 %v498, 96
    %v938 = vpop.permute.xlu0 %937
    %v940 = vsel %vm337, %v441, 0
    %v942 = vsel %vm337, %v932, 0
    %v944 = vsel %vm337, %v934, 0
    %v946 = vsel %vm337, %v936, 0
    %v948 = vsel %vm337, %v938, 0
    %950 = vmatprep.subr.mxu0 0.0
    %951 = vmatpush1.xpose.msra.mxu0 %v942
    %952 = vmatprep.subr.mxu0 0.0
    %953 = vmatpush1.xpose.msra.mxu0 %v944
    %954 = vmatprep.subr.mxu0 0.0
    %955 = vmatpush1.xpose.msra.mxu0 %v946
    %956 = vmatprep.subr.mxu0 0.0
    %957 = vmatpush1.xpose.msra.mxu0 %v948
    %958 = vmatprep.subr.mxu0 0.0
    %959 = vmatpush1.xpose.msra.mxu0 0.0
    %960 = vmatprep.subr.mxu0 0.0
    %961 = vmatpush1.xpose.msra.mxu0 0.0
    %962 = vmatprep.subr.mxu0 0.0
    %963 = vmatpush1.xpose.msra.mxu0 0.0
    %964 = vmatprep.subr.mxu0 0.0
    %965 = vmatpush1.xpose.msra.mxu0 0.0
    %966 = vmatprep.subr.mxu0 0.0
    %967 = vmatpush1.xpose.msra.mxu0 0.0
    %968 = vmatprep.subr.mxu0 0.0
    %969 = vmatpush1.xpose.msra.mxu0 0.0
    %970 = vmatprep.subr.mxu0 0.0
    %971 = vmatpush1.xpose.msra.mxu0 0.0
    %972 = vmatprep.subr.mxu0 0.0
    %973 = vmatpush1.xpose.msra.mxu0 0.0
    %974 = vmatprep.subr.mxu0 0.0
    %975 = vmatpush1.xpose.msra.mxu0 0.0
    %976 = vmatprep.subr.mxu0 0.0
    %977 = vmatpush1.xpose.msra.mxu0 0.0
    %978 = vmatprep.subr.mxu0 0.0
    %979 = vmatpush1.xpose.msra.mxu0 0.0
    %980 = vmatprep.subr.mxu0 0.0
    %981 = vmatpush1.xpose.msra.mxu0 0.0
    %982 = vmatprep.subr.mxu0 0.0
    %983 = vmatpush1.xpose.msra.mxu0 0.0
    %984 = vmatprep.subr.mxu0 0.0
    %985 = vmatpush1.xpose.msra.mxu0 0.0
    %986 = vmatprep.subr.mxu0 0.0
    %987 = vmatpush1.xpose.msra.mxu0 0.0
    %988 = vmatprep.subr.mxu0 0.0
    %989 = vmatpush1.xpose.msra.mxu0 0.0
    %990 = vmatprep.subr.mxu0 0.0
    %991 = vmatpush1.xpose.msra.mxu0 0.0
    %992 = vmatprep.subr.mxu0 0.0
    %993 = vmatpush1.xpose.msra.mxu0 0.0
    %994 = vmatprep.subr.mxu0 0.0
    %995 = vmatpush1.xpose.msra.mxu0 0.0
    %996 = vmatprep.subr.mxu0 0.0
    %997 = vmatpush1.xpose.msra.mxu0 0.0
    %998 = vmatprep.subr.mxu0 0.0
    %999 = vmatpush1.xpose.msra.mxu0 0.0
    %1000 = vmatprep.subr.mxu0 0.0
    %1001 = vmatpush1.xpose.msra.mxu0 0.0
    %1002 = vmatprep.subr.mxu0 0.0
    %1003 = vmatpush1.xpose.msra.mxu0 0.0
    %1004 = vmatprep.subr.mxu0 0.0
    %1005 = vmatpush1.xpose.msra.mxu0 0.0
    %1006 = vmatprep.subr.mxu0 0.0
    %1007 = vmatpush1.xpose.msra.mxu0 0.0
    %1008 = vmatprep.subr.mxu0 0.0
    %1009 = vmatpush1.xpose.msra.mxu0 0.0
    %1010 = vmatprep.subr.mxu0 0.0
    %1011 = vmatpush1.xpose.msra.mxu0 0.0
    %1012 = vmatprep.subr.mxu0 0.0
    %1013 = vmatpush1.xpose.msra.mxu0 0.0
    %1014 = vmatprep.mubr.f32.mxu0 0.0
    %1015 = vmatmul.mubr.f32.gmra.mrb[0].mxu0 %v940
    %v1016 = vpop.f32.mrb[0].mxu0
    %v1017 = vadd.f32 0.0, %v1016
    %v1018 = vpop.f32.mrb[0].mxu0
    %1019 = vdwg.mxu0
    %1024 = vrot.lane.b32.xlu0 %v499, 96
    %v1025 = vpop.permute.xlu0 %1024
    %1026 = vrot.lane.b32.xlu0 %v500, 96
    %v1027 = vpop.permute.xlu0 %1026
    %1028 = vrot.lane.b32.xlu0 %v501, 96
    %v1029 = vpop.permute.xlu0 %1028
    %1030 = vrot.lane.b32.xlu0 %v502, 96
    %v1031 = vpop.permute.xlu0 %1030
    %v1033 = vsel %vm337, %v446, 0
    %v1035 = vsel %vm337, %v1025, 0
    %v1037 = vsel %vm337, %v1027, 0
    %v1039 = vsel %vm337, %v1029, 0
    %v1041 = vsel %vm337, %v1031, 0
    %1043 = vmatprep.subr.mxu0 0.0
    %1044 = vmatpush1.xpose.msra.mxu0 %v1035
    %1045 = vmatprep.subr.mxu0 0.0
    %1046 = vmatpush1.xpose.msra.mxu0 %v1037
    %1047 = vmatprep.subr.mxu0 0.0
    %1048 = vmatpush1.xpose.msra.mxu0 %v1039
    %1049 = vmatprep.subr.mxu0 0.0
    %1050 = vmatpush1.xpose.msra.mxu0 %v1041
    %1051 = vmatprep.subr.mxu0 0.0
    %1052 = vmatpush1.xpose.msra.mxu0 0.0
    %1053 = vmatprep.subr.mxu0 0.0
    %1054 = vmatpush1.xpose.msra.mxu0 0.0
    %1055 = vmatprep.subr.mxu0 0.0
    %1056 = vmatpush1.xpose.msra.mxu0 0.0
    %1057 = vmatprep.subr.mxu0 0.0
    %1058 = vmatpush1.xpose.msra.mxu0 0.0
    %1059 = vmatprep.subr.mxu0 0.0
    %1060 = vmatpush1.xpose.msra.mxu0 0.0
    %1061 = vmatprep.subr.mxu0 0.0
    %1062 = vmatpush1.xpose.msra.mxu0 0.0
    %1063 = vmatprep.subr.mxu0 0.0
    %1064 = vmatpush1.xpose.msra.mxu0 0.0
    %1065 = vmatprep.subr.mxu0 0.0
    %1066 = vmatpush1.xpose.msra.mxu0 0.0
    %1067 = vmatprep.subr.mxu0 0.0
    %1068 = vmatpush1.xpose.msra.mxu0 0.0
    %1069 = vmatprep.subr.mxu0 0.0
    %1070 = vmatpush1.xpose.msra.mxu0 0.0
    %1071 = vmatprep.subr.mxu0 0.0
    %1072 = vmatpush1.xpose.msra.mxu0 0.0
    %1073 = vmatprep.subr.mxu0 0.0
    %1074 = vmatpush1.xpose.msra.mxu0 0.0
    %1075 = vmatprep.subr.mxu0 0.0
    %1076 = vmatpush1.xpose.msra.mxu0 0.0
    %1077 = vmatprep.subr.mxu0 0.0
    %1078 = vmatpush1.xpose.msra.mxu0 0.0
    %1079 = vmatprep.subr.mxu0 0.0
    %1080 = vmatpush1.xpose.msra.mxu0 0.0
    %1081 = vmatprep.subr.mxu0 0.0
    %1082 = vmatpush1.xpose.msra.mxu0 0.0
    %1083 = vmatprep.subr.mxu0 0.0
    %1084 = vmatpush1.xpose.msra.mxu0 0.0
    %1085 = vmatprep.subr.mxu0 0.0
    %1086 = vmatpush1.xpose.msra.mxu0 0.0
    %1087 = vmatprep.subr.mxu0 0.0
    %1088 = vmatpush1.xpose.msra.mxu0 0.0
    %1089 = vmatprep.subr.mxu0 0.0
    %1090 = vmatpush1.xpose.msra.mxu0 0.0
    %1091 = vmatprep.subr.mxu0 0.0
    %1092 = vmatpush1.xpose.msra.mxu0 0.0
    %1093 = vmatprep.subr.mxu0 0.0
    %1094 = vmatpush1.xpose.msra.mxu0 0.0
    %1095 = vmatprep.subr.mxu0 0.0
    %1096 = vmatpush1.xpose.msra.mxu0 0.0
    %1097 = vmatprep.subr.mxu0 0.0
    %1098 = vmatpush1.xpose.msra.mxu0 0.0
    %1099 = vmatprep.subr.mxu0 0.0
    %1100 = vmatpush1.xpose.msra.mxu0 0.0
    %1101 = vmatprep.subr.mxu0 0.0
    %1102 = vmatpush1.xpose.msra.mxu0 0.0
    %1103 = vmatprep.subr.mxu0 0.0
    %1104 = vmatpush1.xpose.msra.mxu0 0.0
    %1105 = vmatprep.subr.mxu0 0.0
    %1106 = vmatpush1.xpose.msra.mxu0 0.0
    %1107 = vmatprep.mubr.f32.mxu0 0.0
    %1108 = vmatmul.mubr.f32.gmra.mrb[0].mxu0 %v1033
    %v1109 = vpop.f32.mrb[0].mxu0
    %v1110 = vadd.f32 0.0, %v1109
    %v1111 = vpop.f32.mrb[0].mxu0
    %1112 = vdwg.mxu0
    %1117 = vrot.lane.b32.xlu0 %v503, 96
    %v1118 = vpop.permute.xlu0 %1117
    %1119 = vrot.lane.b32.xlu0 %v504, 96
    %v1120 = vpop.permute.xlu0 %1119
    %1121 = vrot.lane.b32.xlu0 %v505, 96
    %v1122 = vpop.permute.xlu0 %1121
    %1123 = vrot.lane.b32.xlu0 %v506, 96
    %v1124 = vpop.permute.xlu0 %1123
    %v1126 = vsel %vm337, %v451, 0
    %v1128 = vsel %vm337, %v1118, 0
    %v1130 = vsel %vm337, %v1120, 0
    %v1132 = vsel %vm337, %v1122, 0
    %v1134 = vsel %vm337, %v1124, 0
    %1136 = vmatprep.subr.mxu0 0.0
    %1137 = vmatpush1.xpose.msra.mxu0 %v1128
    %1138 = vmatprep.subr.mxu0 0.0
    %1139 = vmatpush1.xpose.msra.mxu0 %v1130
    %1140 = vmatprep.subr.mxu0 0.0
    %1141 = vmatpush1.xpose.msra.mxu0 %v1132
    %1142 = vmatprep.subr.mxu0 0.0
    %1143 = vmatpush1.xpose.msra.mxu0 %v1134
    %1144 = vmatprep.subr.mxu0 0.0
    %1145 = vmatpush1.xpose.msra.mxu0 0.0
    %1146 = vmatprep.subr.mxu0 0.0
    %1147 = vmatpush1.xpose.msra.mxu0 0.0
    %1148 = vmatprep.subr.mxu0 0.0
    %1149 = vmatpush1.xpose.msra.mxu0 0.0
    %1150 = vmatprep.subr.mxu0 0.0
    %1151 = vmatpush1.xpose.msra.mxu0 0.0
    %1152 = vmatprep.subr.mxu0 0.0
    %1153 = vmatpush1.xpose.msra.mxu0 0.0
    %1154 = vmatprep.subr.mxu0 0.0
    %1155 = vmatpush1.xpose.msra.mxu0 0.0
    %1156 = vmatprep.subr.mxu0 0.0
    %1157 = vmatpush1.xpose.msra.mxu0 0.0
    %1158 = vmatprep.subr.mxu0 0.0
    %1159 = vmatpush1.xpose.msra.mxu0 0.0
    %1160 = vmatprep.subr.mxu0 0.0
    %1161 = vmatpush1.xpose.msra.mxu0 0.0
    %1162 = vmatprep.subr.mxu0 0.0
    %1163 = vmatpush1.xpose.msra.mxu0 0.0
    %1164 = vmatprep.subr.mxu0 0.0
    %1165 = vmatpush1.xpose.msra.mxu0 0.0
    %1166 = vmatprep.subr.mxu0 0.0
    %1167 = vmatpush1.xpose.msra.mxu0 0.0
    %1168 = vmatprep.subr.mxu0 0.0
    %1169 = vmatpush1.xpose.msra.mxu0 0.0
    %1170 = vmatprep.subr.mxu0 0.0
    %1171 = vmatpush1.xpose.msra.mxu0 0.0
    %1172 = vmatprep.subr.mxu0 0.0
    %1173 = vmatpush1.xpose.msra.mxu0 0.0
    %1174 = vmatprep.subr.mxu0 0.0
    %1175 = vmatpush1.xpose.msra.mxu0 0.0
    %1176 = vmatprep.subr.mxu0 0.0
    %1177 = vmatpush1.xpose.msra.mxu0 0.0
    %1178 = vmatprep.subr.mxu0 0.0
    %1179 = vmatpush1.xpose.msra.mxu0 0.0
    %1180 = vmatprep.subr.mxu0 0.0
    %1181 = vmatpush1.xpose.msra.mxu0 0.0
    %1182 = vmatprep.subr.mxu0 0.0
    %1183 = vmatpush1.xpose.msra.mxu0 0.0
    %1184 = vmatprep.subr.mxu0 0.0
    %1185 = vmatpush1.xpose.msra.mxu0 0.0
    %1186 = vmatprep.subr.mxu0 0.0
    %1187 = vmatpush1.xpose.msra.mxu0 0.0
    %1188 = vmatprep.subr.mxu0 0.0
    %1189 = vmatpush1.xpose.msra.mxu0 0.0
    %1190 = vmatprep.subr.mxu0 0.0
    %1191 = vmatpush1.xpose.msra.mxu0 0.0
    %1192 = vmatprep.subr.mxu0 0.0
    %1193 = vmatpush1.xpose.msra.mxu0 0.0
    %1194 = vmatprep.subr.mxu0 0.0
    %1195 = vmatpush1.xpose.msra.mxu0 0.0
    %1196 = vmatprep.subr.mxu0 0.0
    %1197 = vmatpush1.xpose.msra.mxu0 0.0
    %1198 = vmatprep.subr.mxu0 0.0
    %1199 = vmatpush1.xpose.msra.mxu0 0.0
    %1200 = vmatprep.mubr.f32.mxu0 0.0
    %1201 = vmatmul.mubr.f32.gmra.mrb[0].mxu0 %v1126
    %v1202 = vpop.f32.mrb[0].mxu0
    %v1203 = vadd.f32 0.0, %v1202
    %v1204 = vpop.f32.mrb[0].mxu0
    %1205 = vdwg.mxu0
    %1210 = vrot.lane.b32.xlu0 %v507, 96
    %v1211 = vpop.permute.xlu0 %1210
    %1212 = vrot.lane.b32.xlu0 %v508, 96
    %v1213 = vpop.permute.xlu0 %1212
    %1214 = vrot.lane.b32.xlu0 %v509, 96
    %v1215 = vpop.permute.xlu0 %1214
    %1216 = vrot.lane.b32.xlu0 %v510, 96
    %v1217 = vpop.permute.xlu0 %1216
    %v1219 = vsel %vm337, %v456, 0
    %v1221 = vsel %vm337, %v1211, 0
    %v1223 = vsel %vm337, %v1213, 0
    %v1225 = vsel %vm337, %v1215, 0
    %v1227 = vsel %vm337, %v1217, 0
    %1229 = vmatprep.subr.mxu0 0.0
    %1230 = vmatpush1.xpose.msra.mxu0 %v1221
    %1231 = vmatprep.subr.mxu0 0.0
    %1232 = vmatpush1.xpose.msra.mxu0 %v1223
    %1233 = vmatprep.subr.mxu0 0.0
    %1234 = vmatpush1.xpose.msra.mxu0 %v1225
    %1235 = vmatprep.subr.mxu0 0.0
    %1236 = vmatpush1.xpose.msra.mxu0 %v1227
    %1237 = vmatprep.subr.mxu0 0.0
    %1238 = vmatpush1.xpose.msra.mxu0 0.0
    %1239 = vmatprep.subr.mxu0 0.0
    %1240 = vmatpush1.xpose.msra.mxu0 0.0
    %1241 = vmatprep.subr.mxu0 0.0
    %1242 = vmatpush1.xpose.msra.mxu0 0.0
    %1243 = vmatprep.subr.mxu0 0.0
    %1244 = vmatpush1.xpose.msra.mxu0 0.0
    %1245 = vmatprep.subr.mxu0 0.0
    %1246 = vmatpush1.xpose.msra.mxu0 0.0
    %1247 = vmatprep.subr.mxu0 0.0
    %1248 = vmatpush1.xpose.msra.mxu0 0.0
    %1249 = vmatprep.subr.mxu0 0.0
    %1250 = vmatpush1.xpose.msra.mxu0 0.0
    %1251 = vmatprep.subr.mxu0 0.0
    %1252 = vmatpush1.xpose.msra.mxu0 0.0
    %1253 = vmatprep.subr.mxu0 0.0
    %1254 = vmatpush1.xpose.msra.mxu0 0.0
    %1255 = vmatprep.subr.mxu0 0.0
    %1256 = vmatpush1.xpose.msra.mxu0 0.0
    %1257 = vmatprep.subr.mxu0 0.0
    %1258 = vmatpush1.xpose.msra.mxu0 0.0
    %1259 = vmatprep.subr.mxu0 0.0
    %1260 = vmatpush1.xpose.msra.mxu0 0.0
    %1261 = vmatprep.subr.mxu0 0.0
    %1262 = vmatpush1.xpose.msra.mxu0 0.0
    %1263 = vmatprep.subr.mxu0 0.0
    %1264 = vmatpush1.xpose.msra.mxu0 0.0
    %1265 = vmatprep.subr.mxu0 0.0
    %1266 = vmatpush1.xpose.msra.mxu0 0.0
    %1267 = vmatprep.subr.mxu0 0.0
    %1268 = vmatpush1.xpose.msra.mxu0 0.0
    %1269 = vmatprep.subr.mxu0 0.0
    %1270 = vmatpush1.xpose.msra.mxu0 0.0
    %1271 = vmatprep.subr.mxu0 0.0
    %1272 = vmatpush1.xpose.msra.mxu0 0.0
    %1273 = vmatprep.subr.mxu0 0.0
    %1274 = vmatpush1.xpose.msra.mxu0 0.0
    %1275 = vmatprep.subr.mxu0 0.0
    %1276 = vmatpush1.xpose.msra.mxu0 0.0
    %1277 = vmatprep.subr.mxu0 0.0
    %1278 = vmatpush1.xpose.msra.mxu0 0.0
    %1279 = vmatprep.subr.mxu0 0.0
    %1280 = vmatpush1.xpose.msra.mxu0 0.0
    %1281 = vmatprep.subr.mxu0 0.0
    %1282 = vmatpush1.xpose.msra.mxu0 0.0
    %1283 = vmatprep.subr.mxu0 0.0
    %1284 = vmatpush1.xpose.msra.mxu0 0.0
    %1285 = vmatprep.subr.mxu0 0.0
    %1286 = vmatpush1.xpose.msra.mxu0 0.0
    %1287 = vmatprep.subr.mxu0 0.0
    %1288 = vmatpush1.xpose.msra.mxu0 0.0
    %1289 = vmatprep.subr.mxu0 0.0
    %1290 = vmatpush1.xpose.msra.mxu0 0.0
    %1291 = vmatprep.subr.mxu0 0.0
    %1292 = vmatpush1.xpose.msra.mxu0 0.0
    %1293 = vmatprep.mubr.f32.mxu0 0.0
    %1294 = vmatmul.mubr.f32.gmra.mrb[0].mxu0 %v1219
    %v1295 = vpop.f32.mrb[0].mxu0
    %v1296 = vadd.f32 0.0, %v1295
    %v1297 = vpop.f32.mrb[0].mxu0
    %1298 = vdwg.mxu0
    %vm1299 = vcmask 64512
    %v1300 = vsel %vm1299, %v645, -inf
    %1301 = vmax.xlane.f32.xlu0 %v1300
    %v1302 = vpop.xlane.xlu0 %1301
    %v1303 = vsel %vm1299, %v738, -inf
    %1304 = vmax.xlane.f32.xlu0 %v1303
    %v1305 = vpop.xlane.xlu0 %1304
    %v1306 = vsel %vm1299, %v831, -inf
    %1307 = vmax.xlane.f32.xlu0 %v1306
    %v1308 = vpop.xlane.xlu0 %1307
    %v1309 = vsel %vm1299, %v924, -inf
    %1310 = vmax.xlane.f32.xlu0 %v1309
    %v1311 = vpop.xlane.xlu0 %1310
    %v1312 = vsel %vm1299, %v1017, -inf
    %1313 = vmax.xlane.f32.xlu0 %v1312
    %v1314 = vpop.xlane.xlu0 %1313
    %v1315 = vsel %vm1299, %v1110, -inf
    %1316 = vmax.xlane.f32.xlu0 %v1315
    %v1317 = vpop.xlane.xlu0 %1316
    %v1318 = vsel %vm1299, %v1203, -inf
    %1319 = vmax.xlane.f32.xlu0 %v1318
    %v1320 = vpop.xlane.xlu0 %1319
    %v1321 = vsel %vm1299, %v1296, -inf
    %1322 = vmax.xlane.f32.xlu0 %v1321
    %v1323 = vpop.xlane.xlu0 %1322
    %v1324 = vsub.f32 %v645, %v1302
    %v1325 = vsub.f32 %v738, %v1305
    %v1326 = vsub.f32 %v831, %v1308
    %v1327 = vsub.f32 %v924, %v1311
    %v1328 = vsub.f32 %v1017, %v1314
    %v1329 = vsub.f32 %v1110, %v1317
    %v1330 = vsub.f32 %v1203, %v1320
    %v1331 = vsub.f32 %v1296, %v1323
    %v1332 = vmul.f32 %v1324, 1.442695
    %v1333 = vpow.pop %v1332
    %v1334 = vmul.f32 %v1325, 1.442695
    %v1335 = vpow.pop %v1334
    %v1336 = vmul.f32 %v1326, 1.442695
    %v1337 = vpow.pop %v1336
    %v1338 = vmul.f32 %v1327, 1.442695
    %v1339 = vpow.pop %v1338
    %v1340 = vmul.f32 %v1328, 1.442695
    %v1341 = vpow.pop %v1340
    %v1342 = vmul.f32 %v1329, 1.442695
    %v1343 = vpow.pop %v1342
    %v1344 = vmul.f32 %v1330, 1.442695
    %v1345 = vpow.pop %v1344
    %v1346 = vmul.f32 %v1331, 1.442695
    %v1347 = vpow.pop %v1346
    %v1348 = vsel %vm1299, %v1333, 0.0
    %1349 = vadd.xlane.f32.xlu0 %v1348
    %v1350 = vpop.xlane.xlu0 %1349
    %v1351 = vsel %vm1299, %v1335, 0.0
    %1352 = vadd.xlane.f32.xlu0 %v1351
    %v1353 = vpop.xlane.xlu0 %1352
    %v1354 = vsel %vm1299, %v1337, 0.0
    %1355 = vadd.xlane.f32.xlu0 %v1354
    %v1356 = vpop.xlane.xlu0 %1355
    %v1357 = vsel %vm1299, %v1339, 0.0
    %1358 = vadd.xlane.f32.xlu0 %v1357
    %v1359 = vpop.xlane.xlu0 %1358
    %v1360 = vsel %vm1299, %v1341, 0.0
    %1361 = vadd.xlane.f32.xlu0 %v1360
    %v1362 = vpop.xlane.xlu0 %1361
    %v1363 = vsel %vm1299, %v1343, 0.0
    %1364 = vadd.xlane.f32.xlu0 %v1363
    %v1365 = vpop.xlane.xlu0 %1364
    %v1366 = vsel %vm1299, %v1345, 0.0
    %1367 = vadd.xlane.f32.xlu0 %v1366
    %v1368 = vpop.xlane.xlu0 %1367
    %v1369 = vsel %vm1299, %v1347, 0.0
    %1370 = vadd.xlane.f32.xlu0 %v1369
    %v1371 = vpop.xlane.xlu0 %1370
    %v1372 = vrcp.pop %v1350
    %v1373 = vrcp.pop %v1353
    %v1374 = vrcp.pop %v1356
    %v1375 = vrcp.pop %v1359
    %v1376 = vrcp.pop %v1362
    %v1377 = vrcp.pop %v1365
    %v1378 = vrcp.pop %v1368
    %v1379 = vrcp.pop %v1371
    %v1380 = vmul.f32 %v1333, %v1372
    %v1381 = vmul.f32 %v1335, %v1373
    %v1382 = vmul.f32 %v1337, %v1374
    %v1383 = vmul.f32 %v1339, %v1375
    %v1384 = vmul.f32 %v1341, %v1376
    %v1385 = vmul.f32 %v1343, %v1377
    %v1386 = vmul.f32 %v1345, %v1378
    %v1387 = vmul.f32 %v1347, %v1379
    %vm1388 = vcmask 130112
    %v1389 = vsel %vm1388, %v645, -inf
    %1390 = vmax.xlane.f32.xlu0 %v1389
    %v1391 = vpop.xlane.xlu0 %1390
    %v1392 = vsel %vm1388, %v738, -inf
    %1393 = vmax.xlane.f32.xlu0 %v1392
    %v1394 = vpop.xlane.xlu0 %1393
    %v1395 = vsel %vm1388, %v831, -inf
    %1396 = vmax.xlane.f32.xlu0 %v1395
    %v1397 = vpop.xlane.xlu0 %1396
    %v1398 = vsel %vm1388, %v924, -inf
    %1399 = vmax.xlane.f32.xlu0 %v1398
    %v1400 = vpop.xlane.xlu0 %1399
    %v1401 = vsel %vm1388, %v1017, -inf
    %1402 = vmax.xlane.f32.xlu0 %v1401
    %v1403 = vpop.xlane.xlu0 %1402
    %v1404 = vsel %vm1388, %v1110, -inf
    %1405 = vmax.xlane.f32.xlu0 %v1404
    %v1406 = vpop.xlane.xlu0 %1405
    %v1407 = vsel %vm1388, %v1203, -inf
    %1408 = vmax.xlane.f32.xlu0 %v1407
    %v1409 = vpop.xlane.xlu0 %1408
    %v1410 = vsel %vm1388, %v1296, -inf
    %1411 = vmax.xlane.f32.xlu0 %v1410
    %v1412 = vpop.xlane.xlu0 %1411
    %v1413 = vsub.f32 %v645, %v1391
    %v1414 = vsub.f32 %v738, %v1394
    %v1415 = vsub.f32 %v831, %v1397
    %v1416 = vsub.f32 %v924, %v1400
    %v1417 = vsub.f32 %v1017, %v1403
    %v1418 = vsub.f32 %v1110, %v1406
    %v1419 = vsub.f32 %v1203, %v1409
    %v1420 = vsub.f32 %v1296, %v1412
    %v1421 = vmul.f32 %v1413, 1.442695
    %v1422 = vpow.pop %v1421
    %v1423 = vmul.f32 %v1414, 1.442695
    %v1424 = vpow.pop %v1423
    %v1425 = vmul.f32 %v1415, 1.442695
    %v1426 = vpow.pop %v1425
    %v1427 = vmul.f32 %v1416, 1.442695
    %v1428 = vpow.pop %v1427
    %v1429 = vmul.f32 %v1417, 1.442695
    %v1430 = vpow.pop %v1429
    %v1431 = vmul.f32 %v1418, 1.442695
    %v1432 = vpow.pop %v1431
    %v1433 = vmul.f32 %v1419, 1.442695
    %v1434 = vpow.pop %v1433
    %v1435 = vmul.f32 %v1420, 1.442695
    %v1436 = vpow.pop %v1435
    %1445 = vrot.lane.b32.xlu0 %v1422, 120
    %v1446 = vpop.permute.xlu0 %1445
    %1447 = vrot.lane.b32.xlu0 %v1424, 120
    %v1448 = vpop.permute.xlu0 %1447
    %1449 = vrot.lane.b32.xlu0 %v1426, 120
    %v1450 = vpop.permute.xlu0 %1449
    %1451 = vrot.lane.b32.xlu0 %v1428, 120
    %v1452 = vpop.permute.xlu0 %1451
    %1453 = vrot.lane.b32.xlu0 %v1430, 120
    %v1454 = vpop.permute.xlu0 %1453
    %1455 = vrot.lane.b32.xlu0 %v1432, 120
    %v1456 = vpop.permute.xlu0 %1455
    %1457 = vrot.lane.b32.xlu0 %v1434, 120
    %v1458 = vpop.permute.xlu0 %1457
    %1459 = vrot.lane.b32.xlu0 %v1436, 120
    %v1460 = vpop.permute.xlu0 %1459
    %v1469 = vsel %vm1299, %v1446, 0.0
    %1470 = vadd.xlane.f32.xlu0 %v1469
    %v1471 = vpop.xlane.xlu0 %1470
    %v1472 = vsel %vm1299, %v1448, 0.0
    %1473 = vadd.xlane.f32.xlu0 %v1472
    %v1474 = vpop.xlane.xlu0 %1473
    %v1475 = vsel %vm1299, %v1450, 0.0
    %1476 = vadd.xlane.f32.xlu0 %v1475
    %v1477 = vpop.xlane.xlu0 %1476
    %v1478 = vsel %vm1299, %v1452, 0.0
    %1479 = vadd.xlane.f32.xlu0 %v1478
    %v1480 = vpop.xlane.xlu0 %1479
    %v1481 = vsel %vm1299, %v1454, 0.0
    %1482 = vadd.xlane.f32.xlu0 %v1481
    %v1483 = vpop.xlane.xlu0 %1482
    %v1484 = vsel %vm1299, %v1456, 0.0
    %1485 = vadd.xlane.f32.xlu0 %v1484
    %v1486 = vpop.xlane.xlu0 %1485
    %v1487 = vsel %vm1299, %v1458, 0.0
    %1488 = vadd.xlane.f32.xlu0 %v1487
    %v1489 = vpop.xlane.xlu0 %1488
    %v1490 = vsel %vm1299, %v1460, 0.0
    %1491 = vadd.xlane.f32.xlu0 %v1490
    %v1492 = vpop.xlane.xlu0 %1491
    %v1493 = vrcp.pop %v1471
    %v1494 = vrcp.pop %v1474
    %v1495 = vrcp.pop %v1477
    %v1496 = vrcp.pop %v1480
    %v1497 = vrcp.pop %v1483
    %v1498 = vrcp.pop %v1486
    %v1499 = vrcp.pop %v1489
    %v1500 = vrcp.pop %v1492
    %v1501 = vmul.f32 %v1422, %v1493
    %v1502 = vmul.f32 %v1424, %v1494
    %v1503 = vmul.f32 %v1426, %v1495
    %v1504 = vmul.f32 %v1428, %v1496
    %v1505 = vmul.f32 %v1430, %v1497
    %v1506 = vmul.f32 %v1432, %v1498
    %v1507 = vmul.f32 %v1434, %v1499
    %v1508 = vmul.f32 %v1436, %v1500
    %vm1509 = vcmask 195712
    %v1510 = vsel %vm1509, %v645, -inf
    %1511 = vmax.xlane.f32.xlu0 %v1510
    %v1512 = vpop.xlane.xlu0 %1511
    %v1513 = vsel %vm1509, %v738, -inf
    %1514 = vmax.xlane.f32.xlu0 %v1513
    %v1515 = vpop.xlane.xlu0 %1514
    %v1516 = vsel %vm1509, %v831, -inf
    %1517 = vmax.xlane.f32.xlu0 %v1516
    %v1518 = vpop.xlane.xlu0 %1517
    %v1519 = vsel %vm1509, %v924, -inf
    %1520 = vmax.xlane.f32.xlu0 %v1519
    %v1521 = vpop.xlane.xlu0 %1520
    %v1522 = vsel %vm1509, %v1017, -inf
    %1523 = vmax.xlane.f32.xlu0 %v1522
    %v1524 = vpop.xlane.xlu0 %1523
    %v1525 = vsel %vm1509, %v1110, -inf
    %1526 = vmax.xlane.f32.xlu0 %v1525
    %v1527 = vpop.xlane.xlu0 %1526
    %v1528 = vsel %vm1509, %v1203, -inf
    %1529 = vmax.xlane.f32.xlu0 %v1528
    %v1530 = vpop.xlane.xlu0 %1529
    %v1531 = vsel %vm1509, %v1296, -inf
    %1532 = vmax.xlane.f32.xlu0 %v1531
    %v1533 = vpop.xlane.xlu0 %1532
    %v1534 = vsub.f32 %v645, %v1512
    %v1535 = vsub.f32 %v738, %v1515
    %v1536 = vsub.f32 %v831, %v1518
    %v1537 = vsub.f32 %v924, %v1521
    %v1538 = vsub.f32 %v1017, %v1524
    %v1539 = vsub.f32 %v1110, %v1527
    %v1540 = vsub.f32 %v1203, %v1530
    %v1541 = vsub.f32 %v1296, %v1533
    %v1542 = vmul.f32 %v1534, 1.442695
    %v1543 = vpow.pop %v1542
    %v1544 = vmul.f32 %v1535, 1.442695
    %v1545 = vpow.pop %v1544
    %v1546 = vmul.f32 %v1536, 1.442695
    %v1547 = vpow.pop %v1546
    %v1548 = vmul.f32 %v1537, 1.442695
    %v1549 = vpow.pop %v1548
    %v1550 = vmul.f32 %v1538, 1.442695
    %v1551 = vpow.pop %v1550
    %v1552 = vmul.f32 %v1539, 1.442695
    %v1553 = vpow.pop %v1552
    %v1554 = vmul.f32 %v1540, 1.442695
    %v1555 = vpow.pop %v1554
    %v1556 = vmul.f32 %v1541, 1.442695
    %v1557 = vpow.pop %v1556
    %1566 = vrot.lane.b32.xlu0 %v1543, 112
    %v1567 = vpop.permute.xlu0 %1566
    %1568 = vrot.lane.b32.xlu0 %v1545, 112
    %v1569 = vpop.permute.xlu0 %1568
    %1570 = vrot.lane.b32.xlu0 %v1547, 112
    %v1571 = vpop.permute.xlu0 %1570
    %1572 = vrot.lane.b32.xlu0 %v1549, 112
    %v1573 = vpop.permute.xlu0 %1572
    %1574 = vrot.lane.b32.xlu0 %v1551, 112
    %v1575 = vpop.permute.xlu0 %1574
    %1576 = vrot.lane.b32.xlu0 %v1553, 112
    %v1577 = vpop.permute.xlu0 %1576
    %1578 = vrot.lane.b32.xlu0 %v1555, 112
    %v1579 = vpop.permute.xlu0 %1578
    %1580 = vrot.lane.b32.xlu0 %v1557, 112
    %v1581 = vpop.permute.xlu0 %1580
    %v1590 = vsel %vm1299, %v1567, 0.0
    %1591 = vadd.xlane.f32.xlu0 %v1590
    %v1592 = vpop.xlane.xlu0 %1591
    %v1593 = vsel %vm1299, %v1569, 0.0
    %1594 = vadd.xlane.f32.xlu0 %v1593
    %v1595 = vpop.xlane.xlu0 %1594
    %v1596 = vsel %vm1299, %v1571, 0.0
    %1597 = vadd.xlane.f32.xlu0 %v1596
    %v1598 = vpop.xlane.xlu0 %1597
    %v1599 = vsel %vm1299, %v1573, 0.0
    %1600 = vadd.xlane.f32.xlu0 %v1599
    %v1601 = vpop.xlane.xlu0 %1600
    %v1602 = vsel %vm1299, %v1575, 0.0
    %1603 = vadd.xlane.f32.xlu0 %v1602
    %v1604 = vpop.xlane.xlu0 %1603
    %v1605 = vsel %vm1299, %v1577, 0.0
    %1606 = vadd.xlane.f32.xlu0 %v1605
    %v1607 = vpop.xlane.xlu0 %1606
    %v1608 = vsel %vm1299, %v1579, 0.0
    %1609 = vadd.xlane.f32.xlu0 %v1608
    %v1610 = vpop.xlane.xlu0 %1609
    %v1611 = vsel %vm1299, %v1581, 0.0
    %1612 = vadd.xlane.f32.xlu0 %v1611
    %v1613 = vpop.xlane.xlu0 %1612
    %v1614 = vrcp.pop %v1592
    %v1615 = vrcp.pop %v1595
    %v1616 = vrcp.pop %v1598
    %v1617 = vrcp.pop %v1601
    %v1618 = vrcp.pop %v1604
    %v1619 = vrcp.pop %v1607
    %v1620 = vrcp.pop %v1610
    %v1621 = vrcp.pop %v1613
    %v1622 = vmul.f32 %v1543, %v1614
    %v1623 = vmul.f32 %v1545, %v1615
    %v1624 = vmul.f32 %v1547, %v1616
    %v1625 = vmul.f32 %v1549, %v1617
    %v1626 = vmul.f32 %v1551, %v1618
    %v1627 = vmul.f32 %v1553, %v1619
    %v1628 = vmul.f32 %v1555, %v1620
    %v1629 = vmul.f32 %v1557, %v1621
    %vm1630 = vcmask 261312
    %v1631 = vsel %vm1630, %v645, -inf
    %1632 = vmax.xlane.f32.xlu0 %v1631
    %v1633 = vpop.xlane.xlu0 %1632
    %v1634 = vsel %vm1630, %v738, -inf
    %1635 = vmax.xlane.f32.xlu0 %v1634
    %v1636 = vpop.xlane.xlu0 %1635
    %v1637 = vsel %vm1630, %v831, -inf
    %1638 = vmax.xlane.f32.xlu0 %v1637
    %v1639 = vpop.xlane.xlu0 %1638
    %v1640 = vsel %vm1630, %v924, -inf
    %1641 = vmax.xlane.f32.xlu0 %v1640
    %v1642 = vpop.xlane.xlu0 %1641
    %v1643 = vsel %vm1630, %v1017, -inf
    %1644 = vmax.xlane.f32.xlu0 %v1643
    %v1645 = vpop.xlane.xlu0 %1644
    %v1646 = vsel %vm1630, %v1110, -inf
    %1647 = vmax.xlane.f32.xlu0 %v1646
    %v1648 = vpop.xlane.xlu0 %1647
    %v1649 = vsel %vm1630, %v1203, -inf
    %1650 = vmax.xlane.f32.xlu0 %v1649
    %v1651 = vpop.xlane.xlu0 %1650
    %v1652 = vsel %vm1630, %v1296, -inf
    %1653 = vmax.xlane.f32.xlu0 %v1652
    %v1654 = vpop.xlane.xlu0 %1653
    %v1655 = vsub.f32 %v645, %v1633
    %v1656 = vsub.f32 %v738, %v1636
    %v1657 = vsub.f32 %v831, %v1639
    %v1658 = vsub.f32 %v924, %v1642
    %v1659 = vsub.f32 %v1017, %v1645
    %v1660 = vsub.f32 %v1110, %v1648
    %v1661 = vsub.f32 %v1203, %v1651
    %v1662 = vsub.f32 %v1296, %v1654
    %v1663 = vmul.f32 %v1655, 1.442695
    %v1664 = vpow.pop %v1663
    %v1665 = vmul.f32 %v1656, 1.442695
    %v1666 = vpow.pop %v1665
    %v1667 = vmul.f32 %v1657, 1.442695
    %v1668 = vpow.pop %v1667
    %v1669 = vmul.f32 %v1658, 1.442695
    %v1670 = vpow.pop %v1669
    %v1671 = vmul.f32 %v1659, 1.442695
    %v1672 = vpow.pop %v1671
    %v1673 = vmul.f32 %v1660, 1.442695
    %v1674 = vpow.pop %v1673
    %v1675 = vmul.f32 %v1661, 1.442695
    %v1676 = vpow.pop %v1675
    %v1677 = vmul.f32 %v1662, 1.442695
    %v1678 = vpow.pop %v1677
    %1687 = vrot.lane.b32.xlu0 %v1664, 104
    %v1688 = vpop.permute.xlu0 %1687
    %1689 = vrot.lane.b32.xlu0 %v1666, 104
    %v1690 = vpop.permute.xlu0 %1689
    %1691 = vrot.lane.b32.xlu0 %v1668, 104
    %v1692 = vpop.permute.xlu0 %1691
    %1693 = vrot.lane.b32.xlu0 %v1670, 104
    %v1694 = vpop.permute.xlu0 %1693
    %1695 = vrot.lane.b32.xlu0 %v1672, 104
    %v1696 = vpop.permute.xlu0 %1695
    %1697 = vrot.lane.b32.xlu0 %v1674, 104
    %v1698 = vpop.permute.xlu0 %1697
    %1699 = vrot.lane.b32.xlu0 %v1676, 104
    %v1700 = vpop.permute.xlu0 %1699
    %1701 = vrot.lane.b32.xlu0 %v1678, 104
    %v1702 = vpop.permute.xlu0 %1701
    %v1711 = vsel %vm1299, %v1688, 0.0
    %1712 = vadd.xlane.f32.xlu0 %v1711
    %v1713 = vpop.xlane.xlu0 %1712
    %v1714 = vsel %vm1299, %v1690, 0.0
    %1715 = vadd.xlane.f32.xlu0 %v1714
    %v1716 = vpop.xlane.xlu0 %1715
    %v1717 = vsel %vm1299, %v1692, 0.0
    %1718 = vadd.xlane.f32.xlu0 %v1717
    %v1719 = vpop.xlane.xlu0 %1718
    %v1720 = vsel %vm1299, %v1694, 0.0
    %1721 = vadd.xlane.f32.xlu0 %v1720
    %v1722 = vpop.xlane.xlu0 %1721
    %v1723 = vsel %vm1299, %v1696, 0.0
    %1724 = vadd.xlane.f32.xlu0 %v1723
    %v1725 = vpop.xlane.xlu0 %1724
    %v1726 = vsel %vm1299, %v1698, 0.0
    %1727 = vadd.xlane.f32.xlu0 %v1726
    %v1728 = vpop.xlane.xlu0 %1727
    %v1729 = vsel %vm1299, %v1700, 0.0
    %1730 = vadd.xlane.f32.xlu0 %v1729
    %v1731 = vpop.xlane.xlu0 %1730
    %v1732 = vsel %vm1299, %v1702, 0.0
    %1733 = vadd.xlane.f32.xlu0 %v1732
    %v1734 = vpop.xlane.xlu0 %1733
    %v1735 = vrcp.pop %v1713
    %v1736 = vrcp.pop %v1716
    %v1737 = vrcp.pop %v1719
    %v1738 = vrcp.pop %v1722
    %v1739 = vrcp.pop %v1725
    %v1740 = vrcp.pop %v1728
    %v1741 = vrcp.pop %v1731
    %v1742 = vrcp.pop %v1734
    %v1743 = vmul.f32 %v1664, %v1735
    %v1744 = vmul.f32 %v1666, %v1736
    %v1745 = vmul.f32 %v1668, %v1737
    %v1746 = vmul.f32 %v1670, %v1738
    %v1747 = vmul.f32 %v1672, %v1739
    %v1748 = vmul.f32 %v1674, %v1740
    %v1749 = vmul.f32 %v1676, %v1741
    %v1750 = vmul.f32 %v1678, %v1742
    %v1751 = vsel %vm1299, %v1380, %v1501
    %v1752 = vsel %vm1299, %v1381, %v1502
    %v1753 = vsel %vm1299, %v1382, %v1503
    %v1754 = vsel %vm1299, %v1383, %v1504
    %v1755 = vsel %vm1299, %v1384, %v1505
    %v1756 = vsel %vm1299, %v1385, %v1506
    %v1757 = vsel %vm1299, %v1386, %v1507
    %v1758 = vsel %vm1299, %v1387, %v1508
    %vm1759 = vcmask 130048
    %v1760 = vsel %vm1759, %v1751, %v1622
    %v1761 = vsel %vm1759, %v1752, %v1623
    %v1762 = vsel %vm1759, %v1753, %v1624
    %v1763 = vsel %vm1759, %v1754, %v1625
    %v1764 = vsel %vm1759, %v1755, %v1626
    %v1765 = vsel %vm1759, %v1756, %v1627
    %v1766 = vsel %vm1759, %v1757, %v1628
    %v1767 = vsel %vm1759, %v1758, %v1629
    %vm1768 = vcmask 195584
    %v1769 = vsel %vm1768, %v1760, %v1743
    %v1770 = vsel %vm1768, %v1761, %v1744
    %v1771 = vsel %vm1768, %v1762, %v1745
    %v1772 = vsel %vm1768, %v1763, %v1746
    %v1773 = vsel %vm1768, %v1764, %v1747
    %v1774 = vsel %vm1768, %v1765, %v1748
    %v1775 = vsel %vm1768, %v1766, %v1749
    %v1776 = vsel %vm1768, %v1767, %v1750
    %1781 = vrot.lane.b32.xlu0 %v523, 64
    %v1782 = vpop.permute.xlu0 %1781
    %1783 = vrot.lane.b32.xlu0 %v524, 64
    %v1784 = vpop.permute.xlu0 %1783
    %1785 = vrot.lane.b32.xlu0 %v525, 64
    %v1786 = vpop.permute.xlu0 %1785
    %1787 = vrot.lane.b32.xlu0 %v526, 64
    %v1788 = vpop.permute.xlu0 %1787
    %v1794 = vsel %vm337, %v1769, 0
    %1796 = vmatprep.subr.mxu0 0.0
    %1797 = vmatpush1.msra.mxu0 %v1782
    %1798 = vmatprep.subr.mxu0 0.0
    %1799 = vmatpush1.msra.mxu0 %v1784
    %1800 = vmatprep.subr.mxu0 0.0
    %1801 = vmatpush1.msra.mxu0 %v1786
    %1802 = vmatprep.subr.mxu0 0.0
    %1803 = vmatpush1.msra.mxu0 %v1788
    %1804 = vmatprep.subr.mxu0 0.0
    %1805 = vmatpush1.msra.mxu0 0.0
    %1806 = vmatprep.subr.mxu0 0.0
    %1807 = vmatpush1.msra.mxu0 0.0
    %1808 = vmatprep.subr.mxu0 0.0
    %1809 = vmatpush1.msra.mxu0 0.0
    %1810 = vmatprep.subr.mxu0 0.0
    %1811 = vmatpush1.msra.mxu0 0.0
    %1812 = vmatprep.subr.mxu0 0.0
    %1813 = vmatpush1.msra.mxu0 0.0
    %1814 = vmatprep.subr.mxu0 0.0
    %1815 = vmatpush1.msra.mxu0 0.0
    %1816 = vmatprep.subr.mxu0 0.0
    %1817 = vmatpush1.msra.mxu0 0.0
    %1818 = vmatprep.subr.mxu0 0.0
    %1819 = vmatpush1.msra.mxu0 0.0
    %1820 = vmatprep.subr.mxu0 0.0
    %1821 = vmatpush1.msra.mxu0 0.0
    %1822 = vmatprep.subr.mxu0 0.0
    %1823 = vmatpush1.msra.mxu0 0.0
    %1824 = vmatprep.subr.mxu0 0.0
    %1825 = vmatpush1.msra.mxu0 0.0
    %1826 = vmatprep.subr.mxu0 0.0
    %1827 = vmatpush1.msra.mxu0 0.0
    %1828 = vmatprep.subr.mxu0 0.0
    %1829 = vmatpush1.msra.mxu0 0.0
    %1830 = vmatprep.subr.mxu0 0.0
    %1831 = vmatpush1.msra.mxu0 0.0
    %1832 = vmatprep.subr.mxu0 0.0
    %1833 = vmatpush1.msra.mxu0 0.0
    %1834 = vmatprep.subr.mxu0 0.0
    %1835 = vmatpush1.msra.mxu0 0.0
    %1836 = vmatprep.subr.mxu0 0.0
    %1837 = vmatpush1.msra.mxu0 0.0
    %1838 = vmatprep.subr.mxu0 0.0
    %1839 = vmatpush1.msra.mxu0 0.0
    %1840 = vmatprep.subr.mxu0 0.0
    %1841 = vmatpush1.msra.mxu0 0.0
    %1842 = vmatprep.subr.mxu0 0.0
    %1843 = vmatpush1.msra.mxu0 0.0
    %1844 = vmatprep.subr.mxu0 0.0
    %1845 = vmatpush1.msra.mxu0 0.0
    %1846 = vmatprep.subr.mxu0 0.0
    %1847 = vmatpush1.msra.mxu0 0.0
    %1848 = vmatprep.subr.mxu0 0.0
    %1849 = vmatpush1.msra.mxu0 0.0
    %1850 = vmatprep.subr.mxu0 0.0
    %1851 = vmatpush1.msra.mxu0 0.0
    %1852 = vmatprep.subr.mxu0 0.0
    %1853 = vmatpush1.msra.mxu0 0.0
    %1854 = vmatprep.subr.mxu0 0.0
    %1855 = vmatpush1.msra.mxu0 0.0
    %1856 = vmatprep.subr.mxu0 0.0
    %1857 = vmatpush1.msra.mxu0 0.0
    %1858 = vmatprep.subr.mxu0 0.0
    %1859 = vmatpush1.msra.mxu0 0.0
    %1860 = vmatprep.mubr.f32.mxu0 0.0
    %1861 = vmatmul.mubr.f32.gmra.mrb[0].mxu0 %v1794
    %v1862 = vpop.f32.mrb[0].mxu0
    %v1863 = vadd.f32 0.0, %v1862
    %v1864 = vpop.f32.mrb[0].mxu0
    %1865 = vdwg.mxu0
    %1870 = vrot.lane.b32.xlu0 %v527, 64
    %v1871 = vpop.permute.xlu0 %1870
    %1872 = vrot.lane.b32.xlu0 %v528, 64
    %v1873 = vpop.permute.xlu0 %1872
    %1874 = vrot.lane.b32.xlu0 %v529, 64
    %v1875 = vpop.permute.xlu0 %1874
    %1876 = vrot.lane.b32.xlu0 %v530, 64
    %v1877 = vpop.permute.xlu0 %1876
    %v1883 = vsel %vm337, %v1770, 0
    %1885 = vmatprep.subr.mxu0 0.0
    %1886 = vmatpush1.msra.mxu0 %v1871
    %1887 = vmatprep.subr.mxu0 0.0
    %1888 = vmatpush1.msra.mxu0 %v1873
    %1889 = vmatprep.subr.mxu0 0.0
    %1890 = vmatpush1.msra.mxu0 %v1875
    %1891 = vmatprep.subr.mxu0 0.0
    %1892 = vmatpush1.msra.mxu0 %v1877
    %1893 = vmatprep.subr.mxu0 0.0
    %1894 = vmatpush1.msra.mxu0 0.0
    %1895 = vmatprep.subr.mxu0 0.0
    %1896 = vmatpush1.msra.mxu0 0.0
    %1897 = vmatprep.subr.mxu0 0.0
    %1898 = vmatpush1.msra.mxu0 0.0
    %1899 = vmatprep.subr.mxu0 0.0
    %1900 = vmatpush1.msra.mxu0 0.0
    %1901 = vmatprep.subr.mxu0 0.0
    %1902 = vmatpush1.msra.mxu0 0.0
    %1903 = vmatprep.subr.mxu0 0.0
    %1904 = vmatpush1.msra.mxu0 0.0
    %1905 = vmatprep.subr.mxu0 0.0
    %1906 = vmatpush1.msra.mxu0 0.0
    %1907 = vmatprep.subr.mxu0 0.0
    %1908 = vmatpush1.msra.mxu0 0.0
    %1909 = vmatprep.subr.mxu0 0.0
    %1910 = vmatpush1.msra.mxu0 0.0
    %1911 = vmatprep.subr.mxu0 0.0
    %1912 = vmatpush1.msra.mxu0 0.0
    %1913 = vmatprep.subr.mxu0 0.0
    %1914 = vmatpush1.msra.mxu0 0.0
    %1915 = vmatprep.subr.mxu0 0.0
    %1916 = vmatpush1.msra.mxu0 0.0
    %1917 = vmatprep.subr.mxu0 0.0
    %1918 = vmatpush1.msra.mxu0 0.0
    %1919 = vmatprep.subr.mxu0 0.0
    %1920 = vmatpush1.msra.mxu0 0.0
    %1921 = vmatprep.subr.mxu0 0.0
    %1922 = vmatpush1.msra.mxu0 0.0
    %1923 = vmatprep.subr.mxu0 0.0
    %1924 = vmatpush1.msra.mxu0 0.0
    %1925 = vmatprep.subr.mxu0 0.0
    %1926 = vmatpush1.msra.mxu0 0.0
    %1927 = vmatprep.subr.mxu0 0.0
    %1928 = vmatpush1.msra.mxu0 0.0
    %1929 = vmatprep.subr.mxu0 0.0
    %1930 = vmatpush1.msra.mxu0 0.0
    %1931 = vmatprep.subr.mxu0 0.0
    %1932 = vmatpush1.msra.mxu0 0.0
    %1933 = vmatprep.subr.mxu0 0.0
    %1934 = vmatpush1.msra.mxu0 0.0
    %1935 = vmatprep.subr.mxu0 0.0
    %1936 = vmatpush1.msra.mxu0 0.0
    %1937 = vmatprep.subr.mxu0 0.0
    %1938 = vmatpush1.msra.mxu0 0.0
    %1939 = vmatprep.subr.mxu0 0.0
    %1940 = vmatpush1.msra.mxu0 0.0
    %1941 = vmatprep.subr.mxu0 0.0
    %1942 = vmatpush1.msra.mxu0 0.0
    %1943 = vmatprep.subr.mxu0 0.0
    %1944 = vmatpush1.msra.mxu0 0.0
    %1945 = vmatprep.subr.mxu0 0.0
    %1946 = vmatpush1.msra.mxu0 0.0
    %1947 = vmatprep.subr.mxu0 0.0
    %1948 = vmatpush1.msra.mxu0 0.0
    %1949 = vmatprep.mubr.f32.mxu0 0.0
    %1950 = vmatmul.mubr.f32.gmra.mrb[0].mxu0 %v1883
    %v1951 = vpop.f32.mrb[0].mxu0
    %v1952 = vadd.f32 0.0, %v1951
    %v1953 = vpop.f32.mrb[0].mxu0
    %1954 = vdwg.mxu0
    %1959 = vrot.lane.b32.xlu0 %v531, 64
    %v1960 = vpop.permute.xlu0 %1959
    %1961 = vrot.lane.b32.xlu0 %v532, 64
    %v1962 = vpop.permute.xlu0 %1961
    %1963 = vrot.lane.b32.xlu0 %v533, 64
    %v1964 = vpop.permute.xlu0 %1963
    %1965 = vrot.lane.b32.xlu0 %v534, 64
    %v1966 = vpop.permute.xlu0 %1965
    %v1972 = vsel %vm337, %v1771, 0
    %1974 = vmatprep.subr.mxu0 0.0
    %1975 = vmatpush1.msra.mxu0 %v1960
    %1976 = vmatprep.subr.mxu0 0.0
    %1977 = vmatpush1.msra.mxu0 %v1962
    %1978 = vmatprep.subr.mxu0 0.0
    %1979 = vmatpush1.msra.mxu0 %v1964
    %1980 = vmatprep.subr.mxu0 0.0
    %1981 = vmatpush1.msra.mxu0 %v1966
    %1982 = vmatprep.subr.mxu0 0.0
    %1983 = vmatpush1.msra.mxu0 0.0
    %1984 = vmatprep.subr.mxu0 0.0
    %1985 = vmatpush1.msra.mxu0 0.0
    %1986 = vmatprep.subr.mxu0 0.0
    %1987 = vmatpush1.msra.mxu0 0.0
    %1988 = vmatprep.subr.mxu0 0.0
    %1989 = vmatpush1.msra.mxu0 0.0
    %1990 = vmatprep.subr.mxu0 0.0
    %1991 = vmatpush1.msra.mxu0 0.0
    %1992 = vmatprep.subr.mxu0 0.0
    %1993 = vmatpush1.msra.mxu0 0.0
    %1994 = vmatprep.subr.mxu0 0.0
    %1995 = vmatpush1.msra.mxu0 0.0
    %1996 = vmatprep.subr.mxu0 0.0
    %1997 = vmatpush1.msra.mxu0 0.0
    %1998 = vmatprep.subr.mxu0 0.0
    %1999 = vmatpush1.msra.mxu0 0.0
    %2000 = vmatprep.subr.mxu0 0.0
    %2001 = vmatpush1.msra.mxu0 0.0
    %2002 = vmatprep.subr.mxu0 0.0
    %2003 = vmatpush1.msra.mxu0 0.0
    %2004 = vmatprep.subr.mxu0 0.0
    %2005 = vmatpush1.msra.mxu0 0.0
    %2006 = vmatprep.subr.mxu0 0.0
    %2007 = vmatpush1.msra.mxu0 0.0
    %2008 = vmatprep.subr.mxu0 0.0
    %2009 = vmatpush1.msra.mxu0 0.0
    %2010 = vmatprep.subr.mxu0 0.0
    %2011 = vmatpush1.msra.mxu0 0.0
    %2012 = vmatprep.subr.mxu0 0.0
    %2013 = vmatpush1.msra.mxu0 0.0
    %2014 = vmatprep.subr.mxu0 0.0
    %2015 = vmatpush1.msra.mxu0 0.0
    %2016 = vmatprep.subr.mxu0 0.0
    %2017 = vmatpush1.msra.mxu0 0.0
    %2018 = vmatprep.subr.mxu0 0.0
    %2019 = vmatpush1.msra.mxu0 0.0
    %2020 = vmatprep.subr.mxu0 0.0
    %2021 = vmatpush1.msra.mxu0 0.0
    %2022 = vmatprep.subr.mxu0 0.0
    %2023 = vmatpush1.msra.mxu0 0.0
    %2024 = vmatprep.subr.mxu0 0.0
    %2025 = vmatpush1.msra.mxu0 0.0
    %2026 = vmatprep.subr.mxu0 0.0
    %2027 = vmatpush1.msra.mxu0 0.0
    %2028 = vmatprep.subr.mxu0 0.0
    %2029 = vmatpush1.msra.mxu0 0.0
    %2030 = vmatprep.subr.mxu0 0.0
    %2031 = vmatpush1.msra.mxu0 0.0
    %2032 = vmatprep.subr.mxu0 0.0
    %2033 = vmatpush1.msra.mxu0 0.0
    %2034 = vmatprep.subr.mxu0 0.0
    %2035 = vmatpush1.msra.mxu0 0.0
    %2036 = vmatprep.subr.mxu0 0.0
    %2037 = vmatpush1.msra.mxu0 0.0
    %2038 = vmatprep.mubr.f32.mxu0 0.0
    %2039 = vmatmul.mubr.f32.gmra.mrb[0].mxu0 %v1972
    %v2040 = vpop.f32.mrb[0].mxu0
    %v2041 = vadd.f32 0.0, %v2040
    %v2042 = vpop.f32.mrb[0].mxu0
    %2043 = vdwg.mxu0
    %2048 = vrot.lane.b32.xlu0 %v535, 64
    %v2049 = vpop.permute.xlu0 %2048
    %2050 = vrot.lane.b32.xlu0 %v536, 64
    %v2051 = vpop.permute.xlu0 %2050
    %2052 = vrot.lane.b32.xlu0 %v537, 64
    %v2053 = vpop.permute.xlu0 %2052
    %2054 = vrot.lane.b32.xlu0 %v538, 64
    %v2055 = vpop.permute.xlu0 %2054
    %v2061 = vsel %vm337, %v1772, 0
    %2063 = vmatprep.subr.mxu0 0.0
    %2064 = vmatpush1.msra.mxu0 %v2049
    %2065 = vmatprep.subr.mxu0 0.0
    %2066 = vmatpush1.msra.mxu0 %v2051
    %2067 = vmatprep.subr.mxu0 0.0
    %2068 = vmatpush1.msra.mxu0 %v2053
    %2069 = vmatprep.subr.mxu0 0.0
    %2070 = vmatpush1.msra.mxu0 %v2055
    %2071 = vmatprep.subr.mxu0 0.0
    %2072 = vmatpush1.msra.mxu0 0.0
    %2073 = vmatprep.subr.mxu0 0.0
    %2074 = vmatpush1.msra.mxu0 0.0
    %2075 = vmatprep.subr.mxu0 0.0
    %2076 = vmatpush1.msra.mxu0 0.0
    %2077 = vmatprep.subr.mxu0 0.0
    %2078 = vmatpush1.msra.mxu0 0.0
    %2079 = vmatprep.subr.mxu0 0.0
    %2080 = vmatpush1.msra.mxu0 0.0
    %2081 = vmatprep.subr.mxu0 0.0
    %2082 = vmatpush1.msra.mxu0 0.0
    %2083 = vmatprep.subr.mxu0 0.0
    %2084 = vmatpush1.msra.mxu0 0.0
    %2085 = vmatprep.subr.mxu0 0.0
    %2086 = vmatpush1.msra.mxu0 0.0
    %2087 = vmatprep.subr.mxu0 0.0
    %2088 = vmatpush1.msra.mxu0 0.0
    %2089 = vmatprep.subr.mxu0 0.0
    %2090 = vmatpush1.msra.mxu0 0.0
    %2091 = vmatprep.subr.mxu0 0.0
    %2092 = vmatpush1.msra.mxu0 0.0
    %2093 = vmatprep.subr.mxu0 0.0
    %2094 = vmatpush1.msra.mxu0 0.0
    %2095 = vmatprep.subr.mxu0 0.0
    %2096 = vmatpush1.msra.mxu0 0.0
    %2097 = vmatprep.subr.mxu0 0.0
    %2098 = vmatpush1.msra.mxu0 0.0
    %2099 = vmatprep.subr.mxu0 0.0
    %2100 = vmatpush1.msra.mxu0 0.0
    %2101 = vmatprep.subr.mxu0 0.0
    %2102 = vmatpush1.msra.mxu0 0.0
    %2103 = vmatprep.subr.mxu0 0.0
    %2104 = vmatpush1.msra.mxu0 0.0
    %2105 = vmatprep.subr.mxu0 0.0
    %2106 = vmatpush1.msra.mxu0 0.0
    %2107 = vmatprep.subr.mxu0 0.0
    %2108 = vmatpush1.msra.mxu0 0.0
    %2109 = vmatprep.subr.mxu0 0.0
    %2110 = vmatpush1.msra.mxu0 0.0
    %2111 = vmatprep.subr.mxu0 0.0
    %2112 = vmatpush1.msra.mxu0 0.0
    %2113 = vmatprep.subr.mxu0 0.0
    %2114 = vmatpush1.msra.mxu0 0.0
    %2115 = vmatprep.subr.mxu0 0.0
    %2116 = vmatpush1.msra.mxu0 0.0
    %2117 = vmatprep.subr.mxu0 0.0
    %2118 = vmatpush1.msra.mxu0 0.0
    %2119 = vmatprep.subr.mxu0 0.0
    %2120 = vmatpush1.msra.mxu0 0.0
    %2121 = vmatprep.subr.mxu0 0.0
    %2122 = vmatpush1.msra.mxu0 0.0
    %2123 = vmatprep.subr.mxu0 0.0
    %2124 = vmatpush1.msra.mxu0 0.0
    %2125 = vmatprep.subr.mxu0 0.0
    %2126 = vmatpush1.msra.mxu0 0.0
    %2127 = vmatprep.mubr.f32.mxu0 0.0
    %2128 = vmatmul.mubr.f32.gmra.mrb[0].mxu0 %v2061
    %v2129 = vpop.f32.mrb[0].mxu0
    %v2130 = vadd.f32 0.0, %v2129
    %v2131 = vpop.f32.mrb[0].mxu0
    %2132 = vdwg.mxu0
    %2137 = vrot.lane.b32.xlu0 %v539, 64
    %v2138 = vpop.permute.xlu0 %2137
    %2139 = vrot.lane.b32.xlu0 %v540, 64
    %v2140 = vpop.permute.xlu0 %2139
    %2141 = vrot.lane.b32.xlu0 %v541, 64
    %v2142 = vpop.permute.xlu0 %2141
    %2143 = vrot.lane.b32.xlu0 %v542, 64
    %v2144 = vpop.permute.xlu0 %2143
    %v2150 = vsel %vm337, %v1773, 0
    %2152 = vmatprep.subr.mxu0 0.0
    %2153 = vmatpush1.msra.mxu0 %v2138
    %2154 = vmatprep.subr.mxu0 0.0
    %2155 = vmatpush1.msra.mxu0 %v2140
    %2156 = vmatprep.subr.mxu0 0.0
    %2157 = vmatpush1.msra.mxu0 %v2142
    %2158 = vmatprep.subr.mxu0 0.0
    %2159 = vmatpush1.msra.mxu0 %v2144
    %2160 = vmatprep.subr.mxu0 0.0
    %2161 = vmatpush1.msra.mxu0 0.0
    %2162 = vmatprep.subr.mxu0 0.0
    %2163 = vmatpush1.msra.mxu0 0.0
    %2164 = vmatprep.subr.mxu0 0.0
    %2165 = vmatpush1.msra.mxu0 0.0
    %2166 = vmatprep.subr.mxu0 0.0
    %2167 = vmatpush1.msra.mxu0 0.0
    %2168 = vmatprep.subr.mxu0 0.0
    %2169 = vmatpush1.msra.mxu0 0.0
    %2170 = vmatprep.subr.mxu0 0.0
    %2171 = vmatpush1.msra.mxu0 0.0
    %2172 = vmatprep.subr.mxu0 0.0
    %2173 = vmatpush1.msra.mxu0 0.0
    %2174 = vmatprep.subr.mxu0 0.0
    %2175 = vmatpush1.msra.mxu0 0.0
    %2176 = vmatprep.subr.mxu0 0.0
    %2177 = vmatpush1.msra.mxu0 0.0
    %2178 = vmatprep.subr.mxu0 0.0
    %2179 = vmatpush1.msra.mxu0 0.0
    %2180 = vmatprep.subr.mxu0 0.0
    %2181 = vmatpush1.msra.mxu0 0.0
    %2182 = vmatprep.subr.mxu0 0.0
    %2183 = vmatpush1.msra.mxu0 0.0
    %2184 = vmatprep.subr.mxu0 0.0
    %2185 = vmatpush1.msra.mxu0 0.0
    %2186 = vmatprep.subr.mxu0 0.0
    %2187 = vmatpush1.msra.mxu0 0.0
    %2188 = vmatprep.subr.mxu0 0.0
    %2189 = vmatpush1.msra.mxu0 0.0
    %2190 = vmatprep.subr.mxu0 0.0
    %2191 = vmatpush1.msra.mxu0 0.0
    %2192 = vmatprep.subr.mxu0 0.0
    %2193 = vmatpush1.msra.mxu0 0.0
    %2194 = vmatprep.subr.mxu0 0.0
    %2195 = vmatpush1.msra.mxu0 0.0
    %2196 = vmatprep.subr.mxu0 0.0
    %2197 = vmatpush1.msra.mxu0 0.0
    %2198 = vmatprep.subr.mxu0 0.0
    %2199 = vmatpush1.msra.mxu0 0.0
    %2200 = vmatprep.subr.mxu0 0.0
    %2201 = vmatpush1.msra.mxu0 0.0
    %2202 = vmatprep.subr.mxu0 0.0
    %2203 = vmatpush1.msra.mxu0 0.0
    %2204 = vmatprep.subr.mxu0 0.0
    %2205 = vmatpush1.msra.mxu0 0.0
    %2206 = vmatprep.subr.mxu0 0.0
    %2207 = vmatpush1.msra.mxu0 0.0
    %2208 = vmatprep.subr.mxu0 0.0
    %2209 = vmatpush1.msra.mxu0 0.0
    %2210 = vmatprep.subr.mxu0 0.0
    %2211 = vmatpush1.msra.mxu0 0.0
    %2212 = vmatprep.subr.mxu0 0.0
    %2213 = vmatpush1.msra.mxu0 0.0
    %2214 = vmatprep.subr.mxu0 0.0
    %2215 = vmatpush1.msra.mxu0 0.0
    %2216 = vmatprep.mubr.f32.mxu0 0.0
    %2217 = vmatmul.mubr.f32.gmra.mrb[0].mxu0 %v2150
    %v2218 = vpop.f32.mrb[0].mxu0
    %v2219 = vadd.f32 0.0, %v2218
    %v2220 = vpop.f32.mrb[0].mxu0
    %2221 = vdwg.mxu0
    %2226 = vrot.lane.b32.xlu0 %v543, 64
    %v2227 = vpop.permute.xlu0 %2226
    %2228 = vrot.lane.b32.xlu0 %v544, 64
    %v2229 = vpop.permute.xlu0 %2228
    %2230 = vrot.lane.b32.xlu0 %v545, 64
    %v2231 = vpop.permute.xlu0 %2230
    %2232 = vrot.lane.b32.xlu0 %v546, 64
    %v2233 = vpop.permute.xlu0 %2232
    %v2239 = vsel %vm337, %v1774, 0
    %2241 = vmatprep.subr.mxu0 0.0
    %2242 = vmatpush1.msra.mxu0 %v2227
    %2243 = vmatprep.subr.mxu0 0.0
    %2244 = vmatpush1.msra.mxu0 %v2229
    %2245 = vmatprep.subr.mxu0 0.0
    %2246 = vmatpush1.msra.mxu0 %v2231
    %2247 = vmatprep.subr.mxu0 0.0
    %2248 = vmatpush1.msra.mxu0 %v2233
    %2249 = vmatprep.subr.mxu0 0.0
    %2250 = vmatpush1.msra.mxu0 0.0
    %2251 = vmatprep.subr.mxu0 0.0
    %2252 = vmatpush1.msra.mxu0 0.0
    %2253 = vmatprep.subr.mxu0 0.0
    %2254 = vmatpush1.msra.mxu0 0.0
    %2255 = vmatprep.subr.mxu0 0.0
    %2256 = vmatpush1.msra.mxu0 0.0
    %2257 = vmatprep.subr.mxu0 0.0
    %2258 = vmatpush1.msra.mxu0 0.0
    %2259 = vmatprep.subr.mxu0 0.0
    %2260 = vmatpush1.msra.mxu0 0.0
    %2261 = vmatprep.subr.mxu0 0.0
    %2262 = vmatpush1.msra.mxu0 0.0
    %2263 = vmatprep.subr.mxu0 0.0
    %2264 = vmatpush1.msra.mxu0 0.0
    %2265 = vmatprep.subr.mxu0 0.0
    %2266 = vmatpush1.msra.mxu0 0.0
    %2267 = vmatprep.subr.mxu0 0.0
    %2268 = vmatpush1.msra.mxu0 0.0
    %2269 = vmatprep.subr.mxu0 0.0
    %2270 = vmatpush1.msra.mxu0 0.0
    %2271 = vmatprep.subr.mxu0 0.0
    %2272 = vmatpush1.msra.mxu0 0.0
    %2273 = vmatprep.subr.mxu0 0.0
    %2274 = vmatpush1.msra.mxu0 0.0
    %2275 = vmatprep.subr.mxu0 0.0
    %2276 = vmatpush1.msra.mxu0 0.0
    %2277 = vmatprep.subr.mxu0 0.0
    %2278 = vmatpush1.msra.mxu0 0.0
    %2279 = vmatprep.subr.mxu0 0.0
    %2280 = vmatpush1.msra.mxu0 0.0
    %2281 = vmatprep.subr.mxu0 0.0
    %2282 = vmatpush1.msra.mxu0 0.0
    %2283 = vmatprep.subr.mxu0 0.0
    %2284 = vmatpush1.msra.mxu0 0.0
    %2285 = vmatprep.subr.mxu0 0.0
    %2286 = vmatpush1.msra.mxu0 0.0
    %2287 = vmatprep.subr.mxu0 0.0
    %2288 = vmatpush1.msra.mxu0 0.0
    %2289 = vmatprep.subr.mxu0 0.0
    %2290 = vmatpush1.msra.mxu0 0.0
    %2291 = vmatprep.subr.mxu0 0.0
    %2292 = vmatpush1.msra.mxu0 0.0
    %2293 = vmatprep.subr.mxu0 0.0
    %2294 = vmatpush1.msra.mxu0 0.0
    %2295 = vmatprep.subr.mxu0 0.0
    %2296 = vmatpush1.msra.mxu0 0.0
    %2297 = vmatprep.subr.mxu0 0.0
    %2298 = vmatpush1.msra.mxu0 0.0
    %2299 = vmatprep.subr.mxu0 0.0
    %2300 = vmatpush1.msra.mxu0 0.0
    %2301 = vmatprep.subr.mxu0 0.0
    %2302 = vmatpush1.msra.mxu0 0.0
    %2303 = vmatprep.subr.mxu0 0.0
    %2304 = vmatpush1.msra.mxu0 0.0
    %2305 = vmatprep.mubr.f32.mxu0 0.0
    %2306 = vmatmul.mubr.f32.gmra.mrb[0].mxu0 %v2239
    %v2307 = vpop.f32.mrb[0].mxu0
    %v2308 = vadd.f32 0.0, %v2307
    %v2309 = vpop.f32.mrb[0].mxu0
    %2310 = vdwg.mxu0
    %2315 = vrot.lane.b32.xlu0 %v547, 64
    %v2316 = vpop.permute.xlu0 %2315
    %2317 = vrot.lane.b32.xlu0 %v548, 64
    %v2318 = vpop.permute.xlu0 %2317
    %2319 = vrot.lane.b32.xlu0 %v549, 64
    %v2320 = vpop.permute.xlu0 %2319
    %2321 = vrot.lane.b32.xlu0 %v550, 64
    %v2322 = vpop.permute.xlu0 %2321
    %v2328 = vsel %vm337, %v1775, 0
    %2330 = vmatprep.subr.mxu0 0.0
    %2331 = vmatpush1.msra.mxu0 %v2316
    %2332 = vmatprep.subr.mxu0 0.0
    %2333 = vmatpush1.msra.mxu0 %v2318
    %2334 = vmatprep.subr.mxu0 0.0
    %2335 = vmatpush1.msra.mxu0 %v2320
    %2336 = vmatprep.subr.mxu0 0.0
    %2337 = vmatpush1.msra.mxu0 %v2322
    %2338 = vmatprep.subr.mxu0 0.0
    %2339 = vmatpush1.msra.mxu0 0.0
    %2340 = vmatprep.subr.mxu0 0.0
    %2341 = vmatpush1.msra.mxu0 0.0
    %2342 = vmatprep.subr.mxu0 0.0
    %2343 = vmatpush1.msra.mxu0 0.0
    %2344 = vmatprep.subr.mxu0 0.0
    %2345 = vmatpush1.msra.mxu0 0.0
    %2346 = vmatprep.subr.mxu0 0.0
    %2347 = vmatpush1.msra.mxu0 0.0
    %2348 = vmatprep.subr.mxu0 0.0
    %2349 = vmatpush1.msra.mxu0 0.0
    %2350 = vmatprep.subr.mxu0 0.0
    %2351 = vmatpush1.msra.mxu0 0.0
    %2352 = vmatprep.subr.mxu0 0.0
    %2353 = vmatpush1.msra.mxu0 0.0
    %2354 = vmatprep.subr.mxu0 0.0
    %2355 = vmatpush1.msra.mxu0 0.0
    %2356 = vmatprep.subr.mxu0 0.0
    %2357 = vmatpush1.msra.mxu0 0.0
    %2358 = vmatprep.subr.mxu0 0.0
    %2359 = vmatpush1.msra.mxu0 0.0
    %2360 = vmatprep.subr.mxu0 0.0
    %2361 = vmatpush1.msra.mxu0 0.0
    %2362 = vmatprep.subr.mxu0 0.0
    %2363 = vmatpush1.msra.mxu0 0.0
    %2364 = vmatprep.subr.mxu0 0.0
    %2365 = vmatpush1.msra.mxu0 0.0
    %2366 = vmatprep.subr.mxu0 0.0
    %2367 = vmatpush1.msra.mxu0 0.0
    %2368 = vmatprep.subr.mxu0 0.0
    %2369 = vmatpush1.msra.mxu0 0.0
    %2370 = vmatprep.subr.mxu0 0.0
    %2371 = vmatpush1.msra.mxu0 0.0
    %2372 = vmatprep.subr.mxu0 0.0
    %2373 = vmatpush1.msra.mxu0 0.0
    %2374 = vmatprep.subr.mxu0 0.0
    %2375 = vmatpush1.msra.mxu0 0.0
    %2376 = vmatprep.subr.mxu0 0.0
    %2377 = vmatpush1.msra.mxu0 0.0
    %2378 = vmatprep.subr.mxu0 0.0
    %2379 = vmatpush1.msra.mxu0 0.0
    %2380 = vmatprep.subr.mxu0 0.0
    %2381 = vmatpush1.msra.mxu0 0.0
    %2382 = vmatprep.subr.mxu0 0.0
    %2383 = vmatpush1.msra.mxu0 0.0
    %2384 = vmatprep.subr.mxu0 0.0
    %2385 = vmatpush1.msra.mxu0 0.0
    %2386 = vmatprep.subr.mxu0 0.0
    %2387 = vmatpush1.msra.mxu0 0.0
    %2388 = vmatprep.subr.mxu0 0.0
    %2389 = vmatpush1.msra.mxu0 0.0
    %2390 = vmatprep.subr.mxu0 0.0
    %2391 = vmatpush1.msra.mxu0 0.0
    %2392 = vmatprep.subr.mxu0 0.0
    %2393 = vmatpush1.msra.mxu0 0.0
    %2394 = vmatprep.mubr.f32.mxu0 0.0
    %2395 = vmatmul.mubr.f32.gmra.mrb[0].mxu0 %v2328
    %v2396 = vpop.f32.mrb[0].mxu0
    %v2397 = vadd.f32 0.0, %v2396
    %v2398 = vpop.f32.mrb[0].mxu0
    %2399 = vdwg.mxu0
    %2404 = vrot.lane.b32.xlu0 %v551, 64
    %v2405 = vpop.permute.xlu0 %2404
    %2406 = vrot.lane.b32.xlu0 %v552, 64
    %v2407 = vpop.permute.xlu0 %2406
    %2408 = vrot.lane.b32.xlu0 %v553, 64
    %v2409 = vpop.permute.xlu0 %2408
    %2410 = vrot.lane.b32.xlu0 %v554, 64
    %v2411 = vpop.permute.xlu0 %2410
    %v2417 = vsel %vm337, %v1776, 0
    %2419 = vmatprep.subr.mxu0 0.0
    %2420 = vmatpush1.msra.mxu0 %v2405
    %2421 = vmatprep.subr.mxu0 0.0
    %2422 = vmatpush1.msra.mxu0 %v2407
    %2423 = vmatprep.subr.mxu0 0.0
    %2424 = vmatpush1.msra.mxu0 %v2409
    %2425 = vmatprep.subr.mxu0 0.0
    %2426 = vmatpush1.msra.mxu0 %v2411
    %2427 = vmatprep.subr.mxu0 0.0
    %2428 = vmatpush1.msra.mxu0 0.0
    %2429 = vmatprep.subr.mxu0 0.0
    %2430 = vmatpush1.msra.mxu0 0.0
    %2431 = vmatprep.subr.mxu0 0.0
    %2432 = vmatpush1.msra.mxu0 0.0
    %2433 = vmatprep.subr.mxu0 0.0
    %2434 = vmatpush1.msra.mxu0 0.0
    %2435 = vmatprep.subr.mxu0 0.0
    %2436 = vmatpush1.msra.mxu0 0.0
    %2437 = vmatprep.subr.mxu0 0.0
    %2438 = vmatpush1.msra.mxu0 0.0
    %2439 = vmatprep.subr.mxu0 0.0
    %2440 = vmatpush1.msra.mxu0 0.0
    %2441 = vmatprep.subr.mxu0 0.0
    %2442 = vmatpush1.msra.mxu0 0.0
    %2443 = vmatprep.subr.mxu0 0.0
    %2444 = vmatpush1.msra.mxu0 0.0
    %2445 = vmatprep.subr.mxu0 0.0
    %2446 = vmatpush1.msra.mxu0 0.0
    %2447 = vmatprep.subr.mxu0 0.0
    %2448 = vmatpush1.msra.mxu0 0.0
    %2449 = vmatprep.subr.mxu0 0.0
    %2450 = vmatpush1.msra.mxu0 0.0
    %2451 = vmatprep.subr.mxu0 0.0
    %2452 = vmatpush1.msra.mxu0 0.0
    %2453 = vmatprep.subr.mxu0 0.0
    %2454 = vmatpush1.msra.mxu0 0.0
    %2455 = vmatprep.subr.mxu0 0.0
    %2456 = vmatpush1.msra.mxu0 0.0
    %2457 = vmatprep.subr.mxu0 0.0
    %2458 = vmatpush1.msra.mxu0 0.0
    %2459 = vmatprep.subr.mxu0 0.0
    %2460 = vmatpush1.msra.mxu0 0.0
    %2461 = vmatprep.subr.mxu0 0.0
    %2462 = vmatpush1.msra.mxu0 0.0
    %2463 = vmatprep.subr.mxu0 0.0
    %2464 = vmatpush1.msra.mxu0 0.0
    %2465 = vmatprep.subr.mxu0 0.0
    %2466 = vmatpush1.msra.mxu0 0.0
    %2467 = vmatprep.subr.mxu0 0.0
    %2468 = vmatpush1.msra.mxu0 0.0
    %2469 = vmatprep.subr.mxu0 0.0
    %2470 = vmatpush1.msra.mxu0 0.0
    %2471 = vmatprep.subr.mxu0 0.0
    %2472 = vmatpush1.msra.mxu0 0.0
    %2473 = vmatprep.subr.mxu0 0.0
    %2474 = vmatpush1.msra.mxu0 0.0
    %2475 = vmatprep.subr.mxu0 0.0
    %2476 = vmatpush1.msra.mxu0 0.0
    %2477 = vmatprep.subr.mxu0 0.0
    %2478 = vmatpush1.msra.mxu0 0.0
    %2479 = vmatprep.subr.mxu0 0.0
    %2480 = vmatpush1.msra.mxu0 0.0
    %2481 = vmatprep.subr.mxu0 0.0
    %2482 = vmatpush1.msra.mxu0 0.0
    %2483 = vmatprep.mubr.f32.mxu0 0.0
    %2484 = vmatmul.mubr.f32.gmra.mrb[0].mxu0 %v2417
    %v2485 = vpop.f32.mrb[0].mxu0
    %v2486 = vadd.f32 0.0, %v2485
    %v2487 = vpop.f32.mrb[0].mxu0
    %2488 = vdwg.mxu0
    %v2489 = vld [vmem:[#allocation7] sm:$0xff]
    %v2490 = vld [vmem:[#allocation7 + $0x8] sm:$0xff]
    %v2491 = vld [vmem:[#allocation7 + $0x10] sm:$0xff]
    %v2492 = vld [vmem:[#allocation7 + $0x18] sm:$0xff]
    %v2493 = vld [vmem:[%s4] sm:$0x1]
    %v2495 = vlaneseq
    %v2496 = vshrl.u32 %v2495, 7
    %v2497 = vsub.s32 0, %v2496
    %v2498 = vrot.slane %v2493, %v2497
    %v2501 = vsel %vm337, %v1863, 0
    %v2504 = vsel %vm337, %v1952, 0
    %v2507 = vsel %vm337, %v2041, 0
    %v2510 = vsel %vm337, %v2130, 0
    %v2513 = vsel %vm337, %v2219, 0
    %v2516 = vsel %vm337, %v2308, 0
    %v2519 = vsel %vm337, %v2397, 0
    %v2522 = vsel %vm337, %v2486, 0
    %2524 = vmatprep.subr.mxu0 0.0
    %2525 = vmatpush1.msra.mxu0 %v2489
    %2526 = vmatprep.subr.mxu0 0.0
    %2527 = vmatpush1.msra.mxu0 %v2490
    %2528 = vmatprep.subr.mxu0 0.0
    %2529 = vmatpush1.msra.mxu0 %v2491
    %2530 = vmatprep.subr.mxu0 0.0
    %2531 = vmatpush1.msra.mxu0 %v2492
    %2532 = vmatprep.subr.mxu0 0.0
    %2533 = vmatpush1.msra.mxu0 0.0
    %2534 = vmatprep.subr.mxu0 0.0
    %2535 = vmatpush1.msra.mxu0 0.0
    %2536 = vmatprep.subr.mxu0 0.0
    %2537 = vmatpush1.msra.mxu0 0.0
    %2538 = vmatprep.subr.mxu0 0.0
    %2539 = vmatpush1.msra.mxu0 0.0
    %2540 = vmatprep.subr.mxu0 0.0
    %2541 = vmatpush1.msra.mxu0 0.0
    %2542 = vmatprep.subr.mxu0 0.0
    %2543 = vmatpush1.msra.mxu0 0.0
    %2544 = vmatprep.subr.mxu0 0.0
    %2545 = vmatpush1.msra.mxu0 0.0
    %2546 = vmatprep.subr.mxu0 0.0
    %2547 = vmatpush1.msra.mxu0 0.0
    %2548 = vmatprep.subr.mxu0 0.0
    %2549 = vmatpush1.msra.mxu0 0.0
    %2550 = vmatprep.subr.mxu0 0.0
    %2551 = vmatpush1.msra.mxu0 0.0
    %2552 = vmatprep.subr.mxu0 0.0
    %2553 = vmatpush1.msra.mxu0 0.0
    %2554 = vmatprep.subr.mxu0 0.0
    %2555 = vmatpush1.msra.mxu0 0.0
    %2556 = vmatprep.subr.mxu0 0.0
    %2557 = vmatpush1.msra.mxu0 0.0
    %2558 = vmatprep.subr.mxu0 0.0
    %2559 = vmatpush1.msra.mxu0 0.0
    %2560 = vmatprep.subr.mxu0 0.0
    %2561 = vmatpush1.msra.mxu0 0.0
    %2562 = vmatprep.subr.mxu0 0.0
    %2563 = vmatpush1.msra.mxu0 0.0
    %2564 = vmatprep.subr.mxu0 0.0
    %2565 = vmatpush1.msra.mxu0 0.0
    %2566 = vmatprep.subr.mxu0 0.0
    %2567 = vmatpush1.msra.mxu0 0.0
    %2568 = vmatprep.subr.mxu0 0.0
    %2569 = vmatpush1.msra.mxu0 0.0
    %2570 = vmatprep.subr.mxu0 0.0
    %2571 = vmatpush1.msra.mxu0 0.0
    %2572 = vmatprep.subr.mxu0 0.0
    %2573 = vmatpush1.msra.mxu0 0.0
    %2574 = vmatprep.subr.mxu0 0.0
    %2575 = vmatpush1.msra.mxu0 0.0
    %2576 = vmatprep.subr.mxu0 0.0
    %2577 = vmatpush1.msra.mxu0 0.0
    %2578 = vmatprep.subr.mxu0 0.0
    %2579 = vmatpush1.msra.mxu0 0.0
    %2580 = vmatprep.subr.mxu0 0.0
    %2581 = vmatpush1.msra.mxu0 0.0
    %2582 = vmatprep.subr.mxu0 0.0
    %2583 = vmatpush1.msra.mxu0 0.0
    %2584 = vmatprep.subr.mxu0 0.0
    %2585 = vmatpush1.msra.mxu0 0.0
    %2586 = vmatprep.subr.mxu0 0.0
    %2587 = vmatpush1.msra.mxu0 0.0
    %2588 = vmatprep.mubr.f32.mxu0 0.0
    %2589 = vmatmul.mubr.f32.gmra.mrb[0].mxu0 %v2501
    %v2590 = vpop.f32.mrb[0].mxu0
    %v2591 = vadd.f32 %v2498, %v2590
    %v2592 = vpop.f32.mrb[0].mxu0
    %2593 = vmatprep.mubr.f32.mxu0 0.0
    %2594 = vmatmul.mubr.f32.gmra.mrb[0].mxu0 %v2504
    %v2595 = vpop.f32.mrb[0].mxu0
    %v2596 = vadd.f32 %v2498, %v2595
    %v2597 = vpop.f32.mrb[0].mxu0
    %2598 = vmatprep.mubr.f32.mxu0 0.0
    %2599 = vmatmul.mubr.f32.gmra.mrb[0].mxu0 %v2507
    %v2600 = vpop.f32.mrb[0].mxu0
    %v2601 = vadd.f32 %v2498, %v2600
    %v2602 = vpop.f32.mrb[0].mxu0
    %2603 = vmatprep.mubr.f32.mxu0 0.0
    %2604 = vmatmul.mubr.f32.gmra.mrb[0].mxu0 %v2510
    %v2605 = vpop.f32.mrb[0].mxu0
    %v2606 = vadd.f32 %v2498, %v2605
    %v2607 = vpop.f32.mrb[0].mxu0
    %2608 = vmatprep.mubr.f32.mxu0 0.0
    %2609 = vmatmul.mubr.f32.gmra.mrb[0].mxu0 %v2513
    %v2610 = vpop.f32.mrb[0].mxu0
    %v2611 = vadd.f32 %v2498, %v2610
    %v2612 = vpop.f32.mrb[0].mxu0
    %2613 = vmatprep.mubr.f32.mxu0 0.0
    %2614 = vmatmul.mubr.f32.gmra.mrb[0].mxu0 %v2516
    %v2615 = vpop.f32.mrb[0].mxu0
    %v2616 = vadd.f32 %v2498, %v2615
    %v2617 = vpop.f32.mrb[0].mxu0
    %2618 = vmatprep.mubr.f32.mxu0 0.0
    %2619 = vmatmul.mubr.f32.gmra.mrb[0].mxu0 %v2519
    %v2620 = vpop.f32.mrb[0].mxu0
    %v2621 = vadd.f32 %v2498, %v2620
    %v2622 = vpop.f32.mrb[0].mxu0
    %2623 = vmatprep.mubr.f32.mxu0 0.0
    %2624 = vmatmul.mubr.f32.gmra.mrb[0].mxu0 %v2522
    %v2625 = vpop.f32.mrb[0].mxu0
    %v2626 = vadd.f32 %v2498, %v2625
    %v2627 = vpop.f32.mrb[0].mxu0
    %2628 = vdwg.mxu0
    %v2637 = vrot.slane %v2591, 1
    %v2638 = vrot.slane %v2591, 2
    %v2639 = vrot.slane %v2591, 3
    %v2640 = vrot.slane %v2591, 4
    %v2641 = vrot.slane %v2591, 5
    %v2642 = vrot.slane %v2591, 6
    %v2643 = vrot.slane %v2591, 7
    %v2644 = vrot.slane %v2596, 1
    %v2645 = vrot.slane %v2596, 2
    %v2646 = vrot.slane %v2596, 3
    %v2647 = vrot.slane %v2596, 4
    %v2648 = vrot.slane %v2596, 5
    %v2649 = vrot.slane %v2596, 6
    %v2650 = vrot.slane %v2596, 7
    %v2651 = vrot.slane %v2601, 1
    %v2652 = vrot.slane %v2601, 2
    %v2653 = vrot.slane %v2601, 3
    %v2654 = vrot.slane %v2601, 4
    %v2655 = vrot.slane %v2601, 5
    %v2656 = vrot.slane %v2601, 6
    %v2657 = vrot.slane %v2601, 7
    %v2658 = vrot.slane %v2606, 1
    %v2659 = vrot.slane %v2606, 2
    %v2660 = vrot.slane %v2606, 3
    %v2661 = vrot.slane %v2606, 4
    %v2662 = vrot.slane %v2606, 5
    %v2663 = vrot.slane %v2606, 6
    %v2664 = vrot.slane %v2606, 7
    %v2665 = vrot.slane %v2611, 1
    %v2666 = vrot.slane %v2611, 2
    %v2667 = vrot.slane %v2611, 3
    %v2668 = vrot.slane %v2611, 4
    %v2669 = vrot.slane %v2611, 5
    %v2670 = vrot.slane %v2611, 6
    %v2671 = vrot.slane %v2611, 7
    %v2672 = vrot.slane %v2616, 1
    %v2673 = vrot.slane %v2616, 2
    %v2674 = vrot.slane %v2616, 3
    %v2675 = vrot.slane %v2616, 4
    %v2676 = vrot.slane %v2616, 5
    %v2677 = vrot.slane %v2616, 6
    %v2678 = vrot.slane %v2616, 7
    %v2679 = vrot.slane %v2621, 1
    %v2680 = vrot.slane %v2621, 2
    %v2681 = vrot.slane %v2621, 3
    %v2682 = vrot.slane %v2621, 4
    %v2683 = vrot.slane %v2621, 5
    %v2684 = vrot.slane %v2621, 6
    %v2685 = vrot.slane %v2621, 7
    %v2686 = vrot.slane %v2626, 1
    %v2687 = vrot.slane %v2626, 2
    %v2688 = vrot.slane %v2626, 3
    %v2689 = vrot.slane %v2626, 4
    %v2690 = vrot.slane %v2626, 5
    %v2691 = vrot.slane %v2626, 6
    %v2692 = vrot.slane %v2626, 7
    %v2757 = vadd.f32 %v79, %v2591
    %v2758 = vadd.f32 %v80, %v2637
    %v2759 = vadd.f32 %v81, %v2638
    %v2760 = vadd.f32 %v82, %v2639
    %v2761 = vadd.f32 %v83, %v2640
    %v2762 = vadd.f32 %v84, %v2641
    %v2763 = vadd.f32 %v85, %v2642
    %v2764 = vadd.f32 %v86, %v2643
    %v2765 = vadd.f32 %v95, %v2596
    %v2766 = vadd.f32 %v96, %v2644
    %v2767 = vadd.f32 %v97, %v2645
    %v2768 = vadd.f32 %v98, %v2646
    %v2769 = vadd.f32 %v99, %v2647
    %v2770 = vadd.f32 %v100, %v2648
    %v2771 = vadd.f32 %v101, %v2649
    %v2772 = vadd.f32 %v102, %v2650
    %v2773 = vadd.f32 %v111, %v2601
    %v2774 = vadd.f32 %v112, %v2651
    %v2775 = vadd.f32 %v113, %v2652
    %v2776 = vadd.f32 %v114, %v2653
    %v2777 = vadd.f32 %v115, %v2654
    %v2778 = vadd.f32 %v116, %v2655
    %v2779 = vadd.f32 %v117, %v2656
    %v2780 = vadd.f32 %v118, %v2657
    %v2781 = vadd.f32 %v127, %v2606
    %v2782 = vadd.f32 %v128, %v2658
    %v2783 = vadd.f32 %v129, %v2659
    %v2784 = vadd.f32 %v130, %v2660
    %v2785 = vadd.f32 %v131, %v2661
    %v2786 = vadd.f32 %v132, %v2662
    %v2787 = vadd.f32 %v133, %v2663
    %v2788 = vadd.f32 %v134, %v2664
    %v2789 = vadd.f32 %v87, %v2611
    %v2790 = vadd.f32 %v88, %v2665
    %v2791 = vadd.f32 %v89, %v2666
    %v2792 = vadd.f32 %v90, %v2667
    %v2793 = vadd.f32 %v91, %v2668
    %v2794 = vadd.f32 %v92, %v2669
    %v2795 = vadd.f32 %v93, %v2670
    %v2796 = vadd.f32 %v94, %v2671
    %v2797 = vadd.f32 %v103, %v2616
    %v2798 = vadd.f32 %v104, %v2672
    %v2799 = vadd.f32 %v105, %v2673
    %v2800 = vadd.f32 %v106, %v2674
    %v2801 = vadd.f32 %v107, %v2675
    %v2802 = vadd.f32 %v108, %v2676
    %v2803 = vadd.f32 %v109, %v2677
    %v2804 = vadd.f32 %v110, %v2678
    %v2805 = vadd.f32 %v119, %v2621
    %v2806 = vadd.f32 %v120, %v2679
    %v2807 = vadd.f32 %v121, %v2680
    %v2808 = vadd.f32 %v122, %v2681
    %v2809 = vadd.f32 %v123, %v2682
    %v2810 = vadd.f32 %v124, %v2683
    %v2811 = vadd.f32 %v125, %v2684
    %v2812 = vadd.f32 %v126, %v2685
    %v2813 = vadd.f32 %v135, %v2626
    %v2814 = vadd.f32 %v136, %v2686
    %v2815 = vadd.f32 %v137, %v2687
    %v2816 = vadd.f32 %v138, %v2688
    %v2817 = vadd.f32 %v139, %v2689
    %v2818 = vadd.f32 %v140, %v2690
    %v2819 = vadd.f32 %v141, %v2691
    %v2820 = vadd.f32 %v142, %v2692
    %vm2821 = vcmask 253952
    %2822 = vst.msk [vmem:[#allocation10] sm:$0x1] %vm2821, %v2757
    %2823 = vst.msk [vmem:[#allocation10 + $0x4] sm:$0x1] %vm2821, %v2758
    %2824 = vst.msk [vmem:[#allocation10 + $0x8] sm:$0x1] %vm2821, %v2759
    %2825 = vst.msk [vmem:[#allocation10 + $0xc] sm:$0x1] %vm2821, %v2760
    %2826 = vst.msk [vmem:[#allocation10 + $0x10] sm:$0x1] %vm2821, %v2761
    %2827 = vst.msk [vmem:[#allocation10 + $0x14] sm:$0x1] %vm2821, %v2762
    %2828 = vst.msk [vmem:[#allocation10 + $0x18] sm:$0x1] %vm2821, %v2763
    %2829 = vst.msk [vmem:[#allocation10 + $0x1c] sm:$0x1] %vm2821, %v2764
    %2830 = vst.msk [vmem:[#allocation10 + $0x20] sm:$0x1] %vm2821, %v2789
    %2831 = vst.msk [vmem:[#allocation10 + $0x24] sm:$0x1] %vm2821, %v2790
    %2832 = vst.msk [vmem:[#allocation10 + $0x28] sm:$0x1] %vm2821, %v2791
    %2833 = vst.msk [vmem:[#allocation10 + $0x2c] sm:$0x1] %vm2821, %v2792
    %2834 = vst.msk [vmem:[#allocation10 + $0x30] sm:$0x1] %vm2821, %v2793
    %2835 = vst.msk [vmem:[#allocation10 + $0x34] sm:$0x1] %vm2821, %v2794
    %2836 = vst.msk [vmem:[#allocation10 + $0x38] sm:$0x1] %vm2821, %v2795
    %2837 = vst.msk [vmem:[#allocation10 + $0x3c] sm:$0x1] %vm2821, %v2796
    %2838 = vst.msk [vmem:[#allocation10 + $0x1] sm:$0x1] %vm2821, %v2765
    %2839 = vst.msk [vmem:[#allocation10 + $0x5] sm:$0x1] %vm2821, %v2766
    %2840 = vst.msk [vmem:[#allocation10 + $0x9] sm:$0x1] %vm2821, %v2767
    %2841 = vst.msk [vmem:[#allocation10 + $0xd] sm:$0x1] %vm2821, %v2768
    %2842 = vst.msk [vmem:[#allocation10 + $0x11] sm:$0x1] %vm2821, %v2769
    %2843 = vst.msk [vmem:[#allocation10 + $0x15] sm:$0x1] %vm2821, %v2770
    %2844 = vst.msk [vmem:[#allocation10 + $0x19] sm:$0x1] %vm2821, %v2771
    %2845 = vst.msk [vmem:[#allocation10 + $0x1d] sm:$0x1] %vm2821, %v2772
    %2846 = vst.msk [vmem:[#allocation10 + $0x21] sm:$0x1] %vm2821, %v2797
    %2847 = vst.msk [vmem:[#allocation10 + $0x25] sm:$0x1] %vm2821, %v2798
    %2848 = vst.msk [vmem:[#allocation10 + $0x29] sm:$0x1] %vm2821, %v2799
    %2849 = vst.msk [vmem:[#allocation10 + $0x2d] sm:$0x1] %vm2821, %v2800
    %2850 = vst.msk [vmem:[#allocation10 + $0x31] sm:$0x1] %vm2821, %v2801
    %2851 = vst.msk [vmem:[#allocation10 + $0x35] sm:$0x1] %vm2821, %v2802
    %2852 = vst.msk [vmem:[#allocation10 + $0x39] sm:$0x1] %vm2821, %v2803
    %2853 = vst.msk [vmem:[#allocation10 + $0x3d] sm:$0x1] %vm2821, %v2804
    %2854 = vst.msk [vmem:[#allocation10 + $0x2] sm:$0x1] %vm2821, %v2773
    %2855 = vst.msk [vmem:[#allocation10 + $0x6] sm:$0x1] %vm2821, %v2774
    %2856 = vst.msk [vmem:[#allocation10 + $0xa] sm:$0x1] %vm2821, %v2775
    %2857 = vst.msk [vmem:[#allocation10 + $0xe] sm:$0x1] %vm2821, %v2776
    %2858 = vst.msk [vmem:[#allocation10 + $0x12] sm:$0x1] %vm2821, %v2777
    %2859 = vst.msk [vmem:[#allocation10 + $0x16] sm:$0x1] %vm2821, %v2778
    %2860 = vst.msk [vmem:[#allocation10 + $0x1a] sm:$0x1] %vm2821, %v2779
    %2861 = vst.msk [vmem:[#allocation10 + $0x1e] sm:$0x1] %vm2821, %v2780
    %2862 = vst.msk [vmem:[#allocation10 + $0x22] sm:$0x1] %vm2821, %v2805
    %2863 = vst.msk [vmem:[#allocation10 + $0x26] sm:$0x1] %vm2821, %v2806
    %2864 = vst.msk [vmem:[#allocation10 + $0x2a] sm:$0x1] %vm2821, %v2807
    %2865 = vst.msk [vmem:[#allocation10 + $0x2e] sm:$0x1] %vm2821, %v2808
    %2866 = vst.msk [vmem:[#allocation10 + $0x32] sm:$0x1] %vm2821, %v2809
    %2867 = vst.msk [vmem:[#allocation10 + $0x36] sm:$0x1] %vm2821, %v2810
    %2868 = vst.msk [vmem:[#allocation10 + $0x3a] sm:$0x1] %vm2821, %v2811
    %2869 = vst.msk [vmem:[#allocation10 + $0x3e] sm:$0x1] %vm2821, %v2812
    %2870 = vst.msk [vmem:[#allocation10 + $0x3] sm:$0x1] %vm2821, %v2781
    %2871 = vst.msk [vmem:[#allocation10 + $0x7] sm:$0x1] %vm2821, %v2782
    %2872 = vst.msk [vmem:[#allocation10 + $0xb] sm:$0x1] %vm2821, %v2783
    %2873 = vst.msk [vmem:[#allocation10 + $0xf] sm:$0x1] %vm2821, %v2784
    %2874 = vst.msk [vmem:[#allocation10 + $0x13] sm:$0x1] %vm2821, %v2785
    %2875 = vst.msk [vmem:[#allocation10 + $0x17] sm:$0x1] %vm2821, %v2786
    %2876 = vst.msk [vmem:[#allocation10 + $0x1b] sm:$0x1] %vm2821, %v2787
    %2877 = vst.msk [vmem:[#allocation10 + $0x1f] sm:$0x1] %vm2821, %v2788
    %2878 = vst.msk [vmem:[#allocation10 + $0x23] sm:$0x1] %vm2821, %v2813
    %2879 = vst.msk [vmem:[#allocation10 + $0x27] sm:$0x1] %vm2821, %v2814
    %2880 = vst.msk [vmem:[#allocation10 + $0x2b] sm:$0x1] %vm2821, %v2815
    %2881 = vst.msk [vmem:[#allocation10 + $0x2f] sm:$0x1] %vm2821, %v2816
    %2882 = vst.msk [vmem:[#allocation10 + $0x33] sm:$0x1] %vm2821, %v2817
    %2883 = vst.msk [vmem:[#allocation10 + $0x37] sm:$0x1] %vm2821, %v2818
    %2884 = vst.msk [vmem:[#allocation10 + $0x3b] sm:$0x1] %vm2821, %v2819
    %2885 = vst.msk [vmem:[#allocation10 + $0x3f] sm:$0x1] %vm2821, %v2820
    // Predicated region
    $region42: #{tpu_custom_call.1} parent=1 // pred_check
      _
    $region43: #{tpu_custom_call.1} parent=1 // pred_check_branch
      %2887 = sbr.rel (0) target = $region45
    $region44: #{tpu_custom_call.1} parent=1 // pred_region
      %s2889 = ssub.s32 1024, 1024
      %2890 = vsyncadd [#allocation4], %s2889
      %s2891 = sshll.u32 [#allocation10], 4
      %s2892 = int_to_ptr.vmem [resolvable:$true] %s2891
      %2897 = dma.vmem_to_hbm [thread:$0]  %s2892, 1024, %s6, [#allocation4], 64, 64, 4
    $region45: #{tpu_custom_call.1} parent=1 // pred_fallthru
      _
    // Predicated region
    $region46: #{tpu_custom_call.1} parent=1 // pred_check
      _
    $region47: #{tpu_custom_call.1} parent=1 // pred_check_branch
      %2899 = sbr.rel (0) target = $region49
    $region48: #{tpu_custom_call.1} parent=1 // pred_region
      %2900 = dma.done [#allocation4], 1024
    $region49: #{tpu_custom_call.1} parent=1 // pred_fallthru
      _
    %2901 = vsyncpa [#allocation3], 1
    %2902 = vsyncpa [#allocation6], 1
    %2903 = vsyncpa [#allocation9], 1
    %2904 = vsyncpa [#allocation4], 1

</llo_original>
